<compile_context>
chip_gen: v7x
topology: tpu7x:2x2x1
jax: 0.10.0
libtpu: 0.0.40
codegen_flags: <defaults>
</compile_context>

<pallas_src>
import functools

import jax
import jax.numpy as jnp
from jax.experimental import pallas as pl
from jax.experimental.pallas import tpu as pltpu


def critic_kernel(state_ref, action_ref,
                  w1_ref, b1_ref,
                  w2h_ref, w2a_ref, b2_ref,
                  w3_ref, b3_ref,
                  out_ref, *, action_size):
    # ---- fcs1 + relu:  (TB, S) @ (S, F1) -> (TB, F1) ------------------------
    h1 = jnp.dot(state_ref[...], w1_ref[...],
                 preferred_element_type=jnp.float32) + b1_ref[...]
    h1 = jnp.maximum(h1, 0.0)

    # ---- fc2 on concat([h1, action]) + relu ----------------------------------
    # concat is folded away:  fc2(concat(h, a)) == h @ W2h + a @ W2a + b2.
    h2 = jnp.dot(h1.astype(w2h_ref.dtype), w2h_ref[...],
                 preferred_element_type=jnp.float32) + b2_ref[...]
    # K = action_size (tiny, 4) -> do it on the VPU as broadcast FMAs instead
    # of a nearly-all-padding MXU pass; hides under the fc2 matmul above.
    act = action_ref[...].astype(jnp.float32)
    w2a = w2a_ref[...].astype(jnp.float32)
    for k in range(action_size):
        h2 = h2 + act[:, k:k + 1] * w2a[k:k + 1, :]
    h2 = jnp.maximum(h2, 0.0)

    # ---- fc3 -> scalar Q-value, stored lane-dense as a (1, TB) row -----------
    # An N=1 MXU matmul would waste a whole pass; VPU mul + row reduce is
    # effectively free (XLU slot is idle here).
    q = jnp.sum(h2 * w3_ref[...], axis=-1)                    # (TB,)
    out_ref[...] = (q[None, :] + b3_ref[...]).astype(out_ref.dtype)


def _pick_tile_b(batch):
    """Biggest MXU-friendly batch tile, keeping >=2 grid steps when possible
    so the 'parallel' axis can shard across v7x's two TensorCores."""
    if batch < 128:
        return batch                       # single small step; blocks = full dims
    for cand in (512, 256, 128):           # multiples of 256/128 -> full MXU rows
        if batch >= 2 * cand:
            return cand
    return 128


@functools.partial(jax.jit, static_argnames=("tile_b", "compute_dtype"))
def critic_forward(state, action, params, *, tile_b=None, compute_dtype=None):
    """Fused Critic forward pass.

    state:  (B, state_size)  float32
    action: (B, action_size) float32
    compute_dtype: e.g. jnp.bfloat16 to run the MXU matmuls in bf16 (with f32
                   accumulation) on v6e/v7x; None keeps everything float32.
    returns (B, 1) float32 Q-values
    """
    w1, b1, w2h, w2a, b2, w3, b3 = params
    B, S = state.shape
    A = action.shape[1]
    F1 = w1.shape[1]
    F2 = w2h.shape[1]

    if compute_dtype is not None:
        state = state.astype(compute_dtype)
        action = action.astype(compute_dtype)
        w1 = w1.astype(compute_dtype)
        w2h = w2h.astype(compute_dtype)
        w2a = w2a.astype(compute_dtype)
        # biases, W3 and all accumulation stay in float32.

    if tile_b is None:
        tile_b = _pick_tile_b(B)
    pad = (-B) % tile_b
    if pad:
        state = jnp.pad(state, ((0, pad), (0, 0)))
        action = jnp.pad(action, ((0, pad), (0, 0)))
    Bp = B + pad
    grid = (Bp // tile_b,)

    # Weights are tiny (<= 256x256 each) -> keep whole copies resident.
    def resident(shape):
        return pl.BlockSpec(shape, lambda i: (0, 0))

    out2d = pl.pallas_call(
        functools.partial(critic_kernel, action_size=A),
        out_shape=jax.ShapeDtypeStruct((1, Bp), jnp.float32),
        grid_spec=pltpu.PrefetchScalarGridSpec(
            num_scalar_prefetch=0,
            grid=grid,
            in_specs=[
                pl.BlockSpec((tile_b, S), lambda i: (i, 0)),   # state tile
                pl.BlockSpec((tile_b, A), lambda i: (i, 0)),   # action tile
                resident((S, F1)),                             # W1
                resident((1, F1)),                             # b1
                resident((F1, F2)),                            # W2 (hidden block)
                resident((A, F2)),                             # W2 (action block)
                resident((1, F2)),                             # b2
                resident((1, F2)),                             # W3 (row vector)
                resident((1, 1)),                              # b3
            ],
            out_specs=pl.BlockSpec((1, tile_b), lambda i: (0, i)),
        ),
        compiler_params=pltpu.CompilerParams(
            dimension_semantics=("parallel",)),
    )(state, action, w1, b1, w2h, w2a, b2, w3, b3)

    # (1, Bp) lane-dense kernel output -> (B, 1) column, free layout plumbing.
    return out2d.reshape(Bp, 1)[:B]


def init_critic_params(key, state_size, action_size,
                       fcs1_units=256, fc2_units=256):
    """Deterministic parameter init mirroring Critic.reset_parameters().

    PyTorch stores Linear weights as (out, in); we build them directly as
    (in, out).  hidden_init uses fan_in = weight.size(0) = out_features (as
    written in the reference code), so lim = 1/sqrt(out_features).  Biases
    keep PyTorch's default Linear init: U(-1/sqrt(in), 1/sqrt(in)).
    """
    ks = jax.random.split(key, 7)

    def uniform(k, shape, lim):
        return jax.random.uniform(k, shape, jnp.float32, minval=-lim, maxval=lim)

    lim1 = 1.0 / jnp.sqrt(float(fcs1_units))          # hidden_init(fcs1) quirk
    lim2 = 1.0 / jnp.sqrt(float(fc2_units))           # hidden_init(fc2) quirk

    w1 = uniform(ks[0], (state_size, fcs1_units), lim1)
    b1 = uniform(ks[1], (1, fcs1_units), 1.0 / jnp.sqrt(float(state_size)))

    # fc2 acts on concat([h1, action]); split its weight into two blocks.
    w2h = uniform(ks[2], (fcs1_units, fc2_units), lim2)
    w2a = uniform(ks[3], (action_size, fc2_units), lim2)
    b2 = uniform(ks[4], (1, fc2_units),
                 1.0 / jnp.sqrt(float(fcs1_units + action_size)))

    w3 = uniform(ks[5], (1, fc2_units), 0.003)        # stored as a row for VPU fc3
    b3 = uniform(ks[6], (1, 1), 1.0 / jnp.sqrt(float(fc2_units)))

    return (w1, b1, w2h, w2a, b2, w3, b3)


def critic_reference(state, action, params):
    """Plain-JAX reference for correctness checking."""
    w1, b1, w2h, w2a, b2, w3, b3 = params
    h1 = jax.nn.relu(state @ w1 + b1)
    x = jnp.concatenate([h1, action], axis=1)
    w2 = jnp.concatenate([w2h, w2a], axis=0)
    h2 = jax.nn.relu(x @ w2 + b2)
    return h2 @ w3.T + b3


if __name__ == "__main__":
    # Tennis-like shapes: 2 agents * 24 obs = 48 state dims, 2*2 = 4 action dims.
    batch = 256          # -> tile_b = 128, two "parallel" grid steps
    state_size = 48
    action_size = 4

    key = jax.random.PRNGKey(0)
    k_params, k_state, k_action = jax.random.split(key, 3)

    params = init_critic_params(k_params, state_size, action_size)
    state = jax.random.normal(k_state, (batch, state_size), jnp.float32)
    action = jax.random.uniform(k_action, (batch, action_size), jnp.float32,
                                minval=-1.0, maxval=1.0)

    q_ref = critic_reference(state, action, params)

    # f32 path (default), tight tolerance.
    q = jax.block_until_ready(critic_forward(state, action, params))
    assert q.shape == (batch, 1)
    assert jnp.allclose(q, q_ref, atol=1e-5, rtol=1e-5), "f32 mismatch vs reference"

    # Small / odd batch exercises the single-step (full-block) path.
    q_small = jax.block_until_ready(critic_forward(state[:10], action[:10], params))
    assert jnp.allclose(q_small, q_ref[:10], atol=1e-5, rtol=1e-5), "small-batch mismatch"

    # bf16 compute path (native MXU dtype on v6e/v7x), loose tolerance.
    q_bf16 = jax.block_until_ready(
        critic_forward(state, action, params, compute_dtype=jnp.bfloat16))
    assert q_bf16.shape == (batch, 1)
    assert jnp.max(jnp.abs(q_bf16 - q_ref)) < 1e-2, "bf16 path diverged"

    print("KERNEL_OK")
</pallas_src>

<mosaic_0001>
module attributes {stable_mosaic.version = 11 : i64} {
  func.func @critic_kernel(%arg0: i32, %arg1: memref<128x48xf32, #tpu.memory_space<vmem>>, %arg2: memref<128x4xf32, #tpu.memory_space<vmem>>, %arg3: memref<48x256xf32, #tpu.memory_space<vmem>>, %arg4: memref<1x256xf32, #tpu.memory_space<vmem>>, %arg5: memref<256x256xf32, #tpu.memory_space<vmem>>, %arg6: memref<4x256xf32, #tpu.memory_space<vmem>>, %arg7: memref<1x256xf32, #tpu.memory_space<vmem>>, %arg8: memref<1x256xf32, #tpu.memory_space<vmem>>, %arg9: memref<1x1xf32, #tpu.memory_space<vmem>>, %arg10: memref<1x128xf32, #tpu.memory_space<vmem>>) attributes {dimension_semantics = [#tpu.dimension_semantics<parallel>], iteration_bounds = array<i64: 2>, scalar_prefetch = 0 : i64, scratch_operands = 0 : i64, tpu.core_type = #tpu.core_type<tc>, window_params = [{transform_indices = @transform_0, window_bounds = array<i64: 128, 48>}, {transform_indices = @transform_1, window_bounds = array<i64: 128, 4>}, {pipeline_mode = #tpu.pipeline_mode<synchronous>, transform_indices = @transform_2, window_bounds = array<i64: 48, 256>}, {pipeline_mode = #tpu.pipeline_mode<synchronous>, transform_indices = @transform_3, window_bounds = array<i64: 1, 256>}, {pipeline_mode = #tpu.pipeline_mode<synchronous>, transform_indices = @transform_4, window_bounds = array<i64: 256, 256>}, {pipeline_mode = #tpu.pipeline_mode<synchronous>, transform_indices = @transform_5, window_bounds = array<i64: 4, 256>}, {pipeline_mode = #tpu.pipeline_mode<synchronous>, transform_indices = @transform_6, window_bounds = array<i64: 1, 256>}, {pipeline_mode = #tpu.pipeline_mode<synchronous>, transform_indices = @transform_7, window_bounds = array<i64: 1, 256>}, {pipeline_mode = #tpu.pipeline_mode<synchronous>, transform_indices = @transform_8, window_bounds = array<i64: 1, 1>}, {transform_indices = @transform_9, window_bounds = array<i64: 1, 128>}]} {
    %c0 = arith.constant 0 : index
    %c0_0 = arith.constant 0 : index
    %0 = vector.load %arg1[%c0, %c0_0] : memref<128x48xf32, #tpu.memory_space<vmem>>, vector<128x48xf32>
    %c0_1 = arith.constant 0 : index
    %c0_2 = arith.constant 0 : index
    %1 = vector.load %arg3[%c0_1, %c0_2] : memref<48x256xf32, #tpu.memory_space<vmem>>, vector<48x256xf32>
    %cst = arith.constant dense<0.000000e+00> : vector<128x256xf32>
    %2 = tpu.matmul %0, %1, %cst {dimension_numbers = #tpu.dot_dimension_numbers<[1], [0], [0], [1], [0, 0, 1, 1], [], []>} : vector<128x48xf32>, vector<48x256xf32>, vector<128x256xf32> -> vector<128x256xf32>
    %c0_3 = arith.constant 0 : index
    %c0_4 = arith.constant 0 : index
    %3 = vector.load %arg4[%c0_3, %c0_4] : memref<1x256xf32, #tpu.memory_space<vmem>>, vector<1x256xf32>
    %4 = vector.broadcast %3 : vector<1x256xf32> to vector<128x256xf32>
    %5 = arith.addf %2, %4 : vector<128x256xf32>
    %cst_5 = arith.constant 0.000000e+00 : f32
    %6 = vector.broadcast %cst_5 : f32 to vector<128x256xf32>
    %7 = arith.maximumf %5, %6 : vector<128x256xf32>
    %c0_6 = arith.constant 0 : index
    %c0_7 = arith.constant 0 : index
    %8 = vector.load %arg5[%c0_6, %c0_7] : memref<256x256xf32, #tpu.memory_space<vmem>>, vector<256x256xf32>
    %cst_8 = arith.constant dense<0.000000e+00> : vector<128x256xf32>
    %9 = tpu.matmul %7, %8, %cst_8 {dimension_numbers = #tpu.dot_dimension_numbers<[1], [0], [0], [1], [0, 0, 1, 1], [], []>} : vector<128x256xf32>, vector<256x256xf32>, vector<128x256xf32> -> vector<128x256xf32>
    %c0_9 = arith.constant 0 : index
    %c0_10 = arith.constant 0 : index
    %10 = vector.load %arg7[%c0_9, %c0_10] : memref<1x256xf32, #tpu.memory_space<vmem>>, vector<1x256xf32>
    %11 = vector.broadcast %10 : vector<1x256xf32> to vector<128x256xf32>
    %12 = arith.addf %9, %11 : vector<128x256xf32>
    %c0_11 = arith.constant 0 : index
    %c0_12 = arith.constant 0 : index
    %13 = vector.load %arg2[%c0_11, %c0_12] : memref<128x4xf32, #tpu.memory_space<vmem>>, vector<128x4xf32>
    %c0_13 = arith.constant 0 : index
    %c0_14 = arith.constant 0 : index
    %14 = vector.load %arg6[%c0_13, %c0_14] : memref<4x256xf32, #tpu.memory_space<vmem>>, vector<4x256xf32>
    %15 = vector.extract_strided_slice %13 {offsets = [0, 0], sizes = [128, 1], strides = [1, 1]} : vector<128x4xf32> to vector<128x1xf32>
    %16 = vector.extract_strided_slice %14 {offsets = [0, 0], sizes = [1, 256], strides = [1, 1]} : vector<4x256xf32> to vector<1x256xf32>
    %17 = vector.broadcast %15 : vector<128x1xf32> to vector<128x256xf32>
    %18 = vector.broadcast %16 : vector<1x256xf32> to vector<128x256xf32>
    %19 = arith.mulf %17, %18 : vector<128x256xf32>
    %20 = arith.addf %12, %19 : vector<128x256xf32>
    %21 = vector.extract_strided_slice %13 {offsets = [0, 1], sizes = [128, 1], strides = [1, 1]} : vector<128x4xf32> to vector<128x1xf32>
    %22 = vector.extract_strided_slice %14 {offsets = [1, 0], sizes = [1, 256], strides = [1, 1]} : vector<4x256xf32> to vector<1x256xf32>
    %23 = vector.broadcast %21 : vector<128x1xf32> to vector<128x256xf32>
    %24 = vector.broadcast %22 : vector<1x256xf32> to vector<128x256xf32>
    %25 = arith.mulf %23, %24 : vector<128x256xf32>
    %26 = arith.addf %20, %25 : vector<128x256xf32>
    %27 = vector.extract_strided_slice %13 {offsets = [0, 2], sizes = [128, 1], strides = [1, 1]} : vector<128x4xf32> to vector<128x1xf32>
    %28 = vector.extract_strided_slice %14 {offsets = [2, 0], sizes = [1, 256], strides = [1, 1]} : vector<4x256xf32> to vector<1x256xf32>
    %29 = vector.broadcast %27 : vector<128x1xf32> to vector<128x256xf32>
    %30 = vector.broadcast %28 : vector<1x256xf32> to vector<128x256xf32>
    %31 = arith.mulf %29, %30 : vector<128x256xf32>
    %32 = arith.addf %26, %31 : vector<128x256xf32>
    %33 = vector.extract_strided_slice %13 {offsets = [0, 3], sizes = [128, 1], strides = [1, 1]} : vector<128x4xf32> to vector<128x1xf32>
    %34 = vector.extract_strided_slice %14 {offsets = [3, 0], sizes = [1, 256], strides = [1, 1]} : vector<4x256xf32> to vector<1x256xf32>
    %35 = vector.broadcast %33 : vector<128x1xf32> to vector<128x256xf32>
    %36 = vector.broadcast %34 : vector<1x256xf32> to vector<128x256xf32>
    %37 = arith.mulf %35, %36 : vector<128x256xf32>
    %38 = arith.addf %32, %37 : vector<128x256xf32>
    %cst_15 = arith.constant 0.000000e+00 : f32
    %39 = vector.broadcast %cst_15 : f32 to vector<128x256xf32>
    %40 = arith.maximumf %38, %39 : vector<128x256xf32>
    %c0_16 = arith.constant 0 : index
    %c0_17 = arith.constant 0 : index
    %41 = vector.load %arg8[%c0_16, %c0_17] : memref<1x256xf32, #tpu.memory_space<vmem>>, vector<1x256xf32>
    %42 = vector.broadcast %41 : vector<1x256xf32> to vector<128x256xf32>
    %43 = arith.mulf %40, %42 : vector<128x256xf32>
    %cst_18 = arith.constant dense<0.000000e+00> : vector<128xf32>
    %44 = vector.multi_reduction <add>, %43, %cst_18 [1] : vector<128x256xf32> to vector<128xf32>
    %45 = vector.shape_cast %44 : vector<128xf32> to vector<1x128xf32>
    %c0_19 = arith.constant 0 : index
    %c0_20 = arith.constant 0 : index
    %46 = vector.load %arg9[%c0_19, %c0_20] : memref<1x1xf32, #tpu.memory_space<vmem>>, vector<1x1xf32>
    %47 = vector.broadcast %46 : vector<1x1xf32> to vector<1x128xf32>
    %48 = arith.addf %45, %47 : vector<1x128xf32>
    %c0_21 = arith.constant 0 : index
    %c0_22 = arith.constant 0 : index
    %49 = vector.load %arg10[%c0_21, %c0_22] : memref<1x128xf32, #tpu.memory_space<vmem>>, vector<1x128xf32>
    tpu.vector_store %arg10[%c0_21, %c0_22], %48 {strides = array<i32>} : memref<1x128xf32, #tpu.memory_space<vmem>>, vector<1x128xf32>,
    return
  }
  func.func @transform_0(%arg0: i32) -> (i32, i32) {
    %c0_i32 = arith.constant 0 : i32
    %c0_i32_0 = arith.constant 0 : i32
    return %arg0, %c0_i32 : i32, i32
  }
  func.func @transform_1(%arg0: i32) -> (i32, i32) {
    %c0_i32 = arith.constant 0 : i32
    %c0_i32_0 = arith.constant 0 : i32
    return %arg0, %c0_i32 : i32, i32
  }
  func.func @transform_2(%arg0: i32) -> (i32, i32) {
    %c0_i32 = arith.constant 0 : i32
    %c0_i32_0 = arith.constant 0 : i32
    %c0_i32_1 = arith.constant 0 : i32
    return %c0_i32, %c0_i32_0 : i32, i32
  }
  func.func @transform_3(%arg0: i32) -> (i32, i32) {
    %c0_i32 = arith.constant 0 : i32
    %c0_i32_0 = arith.constant 0 : i32
    %c0_i32_1 = arith.constant 0 : i32
    return %c0_i32, %c0_i32_0 : i32, i32
  }
  func.func @transform_4(%arg0: i32) -> (i32, i32) {
    %c0_i32 = arith.constant 0 : i32
    %c0_i32_0 = arith.constant 0 : i32
    %c0_i32_1 = arith.constant 0 : i32
    return %c0_i32, %c0_i32_0 : i32, i32
  }
  func.func @transform_5(%arg0: i32) -> (i32, i32) {
    %c0_i32 = arith.constant 0 : i32
    %c0_i32_0 = arith.constant 0 : i32
    %c0_i32_1 = arith.constant 0 : i32
    return %c0_i32, %c0_i32_0 : i32, i32
  }
  func.func @transform_6(%arg0: i32) -> (i32, i32) {
    %c0_i32 = arith.constant 0 : i32
    %c0_i32_0 = arith.constant 0 : i32
    %c0_i32_1 = arith.constant 0 : i32
    return %c0_i32, %c0_i32_0 : i32, i32
  }
  func.func @transform_7(%arg0: i32) -> (i32, i32) {
    %c0_i32 = arith.constant 0 : i32
    %c0_i32_0 = arith.constant 0 : i32
    %c0_i32_1 = arith.constant 0 : i32
    return %c0_i32, %c0_i32_0 : i32, i32
  }
  func.func @transform_8(%arg0: i32) -> (i32, i32) {
    %c0_i32 = arith.constant 0 : i32
    %c0_i32_0 = arith.constant 0 : i32
    %c0_i32_1 = arith.constant 0 : i32
    return %c0_i32, %c0_i32_0 : i32, i32
  }
  func.func @transform_9(%arg0: i32) -> (i32, i32) {
    %c0_i32 = arith.constant 0 : i32
    %c0_i32_0 = arith.constant 0 : i32
    return %c0_i32, %arg0 : i32, i32
  }
}

</mosaic_0001>

<llo_original>
// kernel: critic_forward.1
$region0: #{critic_forward.1}
  #allocation0 [shape = 'u32[]', space=smem, size = 0x4, offset = 0x4, fixed_abs, tag = 'smem constant byte address 0x4 - core index']
  #allocation1 [shape = 'u32[144,128]{1,0:T(1,128)}', space=vmem, size = 0x12000, scoped, tag = 'internal scratch']
  #allocation2 [shape = 'f32[1,1]{1,0:T(1,128)S(1)}', space=vmem, size = 0x200, scoped, tag = 'scoped memory for critic_forward.1']
  %s0 = inlined_call_operand.vmem [shape: f32[256,48], index: 0, kind: input, shape index: {}]
  %s1 = inlined_call_operand.vmem [shape: f32[256,4], index: 1, kind: input, shape index: {}]
  %s2 = inlined_call_operand.vmem [shape: f32[48,256], index: 2, kind: input, shape index: {}]
  %s3 = inlined_call_operand.vmem [shape: f32[1,256], index: 3, kind: input, shape index: {}]
  %s4 = inlined_call_operand.vmem [shape: f32[256,256], index: 4, kind: input, shape index: {}]
  %s5 = inlined_call_operand.vmem [shape: f32[4,256], index: 5, kind: input, shape index: {}]
  %s6 = inlined_call_operand.vmem [shape: f32[1,256], index: 6, kind: input, shape index: {}]
  %s7 = inlined_call_operand.vmem [shape: f32[1,256], index: 7, kind: input, shape index: {}]
  %s8 = inlined_call_operand.<no memory space> [shape: f32[1,1], index: 8, kind: input, shape index: {}]
  %s9 = inlined_call_operand.hbm [shape: f32[1,256], index: 9, kind: output, shape index: {}]
  %s10 = sld [smem:[#allocation0]]
  $region69: #{critic_forward.1} parent=0
    _
  %s12 = ssub.s32 1, %s10
  %s13 = scalar_select 0, %s12, %s10
  %v14 = vstv %s8
  %15 = vst [vmem:[#allocation2] sm:$0x1] %v14
  $region1: #{critic_forward.1} parent=0
    #allocation3 [shape = 'u8[1024]{0}', space=vmem, size = 0x400, scoped, tag = 'output window, operand 0']
    #allocation4 [shape = 's32[2]{0}', space=sflag, size = 0x8, scoped, tag = 'scoped memory for critic_forward.1']
    %16 = vsyncpa [#allocation4], 0
    %s17 = scalar_lea.sflag [#allocation4], 1
    %18 = vsyncpa %s17, 0
    loop: start=0, step=1, limit=4
    $region2: #{critic_forward.1} parent=1 // loop_pre_header
      _
    $region3: #{critic_forward.1} parent=1 // loop_header
      %s20 = sphi 0, %s24
      %p21 = scmp.ge.s32.totalorder %s20, 4
      %s30 = sphi 0, %s32
      %s33 = sphi 0, %s30
      %s34 = sphi 0, %s33
      %s50 = sphi 0, %s34
      %s56 = sphi 0, %s58
      %s59 = sphi 0, %s56
      %s60 = sphi 0, %s59
      %s76 = sphi 0, %s60
      %s80 = sphi 0, %s80
      %s82 = sphi 0, %s80
      %s83 = sphi 0, %s82
      %s97 = sphi 0, %s83
      %s101 = sphi 0, %s101
      %s103 = sphi 0, %s101
      %s104 = sphi 0, %s103
      %s118 = sphi 0, %s104
      %s122 = sphi 0, %s122
      %s124 = sphi 0, %s122
      %s125 = sphi 0, %s124
      %s139 = sphi 0, %s125
      %s143 = sphi 0, %s143
      %s145 = sphi 0, %s143
      %s146 = sphi 0, %s145
      %s160 = sphi 0, %s146
      %s164 = sphi 0, %s164
      %s166 = sphi 0, %s164
      %s167 = sphi 0, %s166
      %s181 = sphi 0, %s167
      %s185 = sphi 0, %s185
      %s187 = sphi 0, %s185
      %s188 = sphi 0, %s187
      %s202 = sphi 0, %s188
      %s206 = sphi 0, %s206
      %s208 = sphi 0, %s206
      %s209 = sphi 0, %s208
      %s223 = sphi 0, %s209
      %s229 = sphi 0, %s231
      %s232 = sphi 0, %s229
      %s233 = sphi 0, %s232
      %s249 = sphi 0, %s233
    $region4: #{critic_forward.1} parent=1 // loop_header_branch
      %23 = sbr.rel (%p21) target = $region8
    $region5: #{critic_forward.1} parent=1 // loop_body
      %s25 = ssub.s32 %s20, 1
      %s26 = ssub.s32 %s20, 2
      %s27 = sadd.s32 %s20, 1
      %s28 = ssub.s32 %s20, %s27
      %p29 = scmp.eq.s32.totalorder %s28, 0
      %s31 = sadd.s32 %s30, 1
      %s32 = scalar_select %p29, %s30, %s31
      %p35 = pneg %p29
      %p36 = scmp.eq.s32.totalorder %s20, 1
      %p37 = por %p35, %p36
      %p38 = scmp.ne.s32.totalorder %s30, %s33
      %p39 = scmp.eq.s32.totalorder %s20, 0
      %p40 = por %p38, %p39
      %p41 = scmp.ne.s32.totalorder %s30, %s33
      %p42 = scmp.eq.s32.totalorder %s25, 1
      %p43 = por %p41, %p42
      %p44 = scmp.ne.s32.totalorder %s33, %s34
      %p45 = scmp.eq.s32.totalorder %s25, 0
      %p46 = por %p44, %p45
      %p47 = scmp.ne.s32.totalorder %s33, %s34
      %p48 = scmp.eq.s32.totalorder %s26, 1
      %p49 = por %p47, %p48
      %p51 = scmp.ne.s32.totalorder %s34, %s50
      %p52 = scmp.eq.s32.totalorder %s26, 0
      %p53 = por %p51, %p52
      %s54 = ssub.s32 %s20, %s27
      %p55 = scmp.eq.s32.totalorder %s54, 0
      %s57 = sadd.s32 %s56, 1
      %s58 = scalar_select %p55, %s56, %s57
      %p61 = pneg %p55
      %p62 = scmp.eq.s32.totalorder %s20, 1
      %p63 = por %p61, %p62
      %p64 = scmp.ne.s32.totalorder %s56, %s59
      %p65 = scmp.eq.s32.totalorder %s20, 0
      %p66 = por %p64, %p65
      %p67 = scmp.ne.s32.totalorder %s56, %s59
      %p68 = scmp.eq.s32.totalorder %s25, 1
      %p69 = por %p67, %p68
      %p70 = scmp.ne.s32.totalorder %s59, %s60
      %p71 = scmp.eq.s32.totalorder %s25, 0
      %p72 = por %p70, %p71
      %p73 = scmp.ne.s32.totalorder %s59, %s60
      %p74 = scmp.eq.s32.totalorder %s26, 1
      %p75 = por %p73, %p74
      %p77 = scmp.ne.s32.totalorder %s60, %s76
      %p78 = scmp.eq.s32.totalorder %s26, 0
      %p79 = por %p77, %p78
      %s81 = sadd.s32 %s80, 1
      %p84 = scmp.eq.s32.totalorder %s20, 1
      %p85 = scmp.ne.s32.totalorder %s80, %s82
      %p86 = scmp.eq.s32.totalorder %s20, 0
      %p87 = por %p85, %p86
      %p88 = scmp.ne.s32.totalorder %s80, %s82
      %p89 = scmp.eq.s32.totalorder %s25, 1
      %p90 = por %p88, %p89
      %p91 = scmp.ne.s32.totalorder %s82, %s83
      %p92 = scmp.eq.s32.totalorder %s25, 0
      %p93 = por %p91, %p92
      %p94 = scmp.ne.s32.totalorder %s82, %s83
      %p95 = scmp.eq.s32.totalorder %s26, 1
      %p96 = por %p94, %p95
      %p98 = scmp.ne.s32.totalorder %s83, %s97
      %p99 = scmp.eq.s32.totalorder %s26, 0
      %p100 = por %p98, %p99
      %s102 = sadd.s32 %s101, 1
      %p105 = scmp.eq.s32.totalorder %s20, 1
      %p106 = scmp.ne.s32.totalorder %s101, %s103
      %p107 = scmp.eq.s32.totalorder %s20, 0
      %p108 = por %p106, %p107
      %p109 = scmp.ne.s32.totalorder %s101, %s103
      %p110 = scmp.eq.s32.totalorder %s25, 1
      %p111 = por %p109, %p110
      %p112 = scmp.ne.s32.totalorder %s103, %s104
      %p113 = scmp.eq.s32.totalorder %s25, 0
      %p114 = por %p112, %p113
      %p115 = scmp.ne.s32.totalorder %s103, %s104
      %p116 = scmp.eq.s32.totalorder %s26, 1
      %p117 = por %p115, %p116
      %p119 = scmp.ne.s32.totalorder %s104, %s118
      %p120 = scmp.eq.s32.totalorder %s26, 0
      %p121 = por %p119, %p120
      %s123 = sadd.s32 %s122, 1
      %p126 = scmp.eq.s32.totalorder %s20, 1
      %p127 = scmp.ne.s32.totalorder %s122, %s124
      %p128 = scmp.eq.s32.totalorder %s20, 0
      %p129 = por %p127, %p128
      %p130 = scmp.ne.s32.totalorder %s122, %s124
      %p131 = scmp.eq.s32.totalorder %s25, 1
      %p132 = por %p130, %p131
      %p133 = scmp.ne.s32.totalorder %s124, %s125
      %p134 = scmp.eq.s32.totalorder %s25, 0
      %p135 = por %p133, %p134
      %p136 = scmp.ne.s32.totalorder %s124, %s125
      %p137 = scmp.eq.s32.totalorder %s26, 1
      %p138 = por %p136, %p137
      %p140 = scmp.ne.s32.totalorder %s125, %s139
      %p141 = scmp.eq.s32.totalorder %s26, 0
      %p142 = por %p140, %p141
      %s144 = sadd.s32 %s143, 1
      %p147 = scmp.eq.s32.totalorder %s20, 1
      %p148 = scmp.ne.s32.totalorder %s143, %s145
      %p149 = scmp.eq.s32.totalorder %s20, 0
      %p150 = por %p148, %p149
      %p151 = scmp.ne.s32.totalorder %s143, %s145
      %p152 = scmp.eq.s32.totalorder %s25, 1
      %p153 = por %p151, %p152
      %p154 = scmp.ne.s32.totalorder %s145, %s146
      %p155 = scmp.eq.s32.totalorder %s25, 0
      %p156 = por %p154, %p155
      %p157 = scmp.ne.s32.totalorder %s145, %s146
      %p158 = scmp.eq.s32.totalorder %s26, 1
      %p159 = por %p157, %p158
      %p161 = scmp.ne.s32.totalorder %s146, %s160
      %p162 = scmp.eq.s32.totalorder %s26, 0
      %p163 = por %p161, %p162
      %s165 = sadd.s32 %s164, 1
      %p168 = scmp.eq.s32.totalorder %s20, 1
      %p169 = scmp.ne.s32.totalorder %s164, %s166
      %p170 = scmp.eq.s32.totalorder %s20, 0
      %p171 = por %p169, %p170
      %p172 = scmp.ne.s32.totalorder %s164, %s166
      %p173 = scmp.eq.s32.totalorder %s25, 1
      %p174 = por %p172, %p173
      %p175 = scmp.ne.s32.totalorder %s166, %s167
      %p176 = scmp.eq.s32.totalorder %s25, 0
      %p177 = por %p175, %p176
      %p178 = scmp.ne.s32.totalorder %s166, %s167
      %p179 = scmp.eq.s32.totalorder %s26, 1
      %p180 = por %p178, %p179
      %p182 = scmp.ne.s32.totalorder %s167, %s181
      %p183 = scmp.eq.s32.totalorder %s26, 0
      %p184 = por %p182, %p183
      %s186 = sadd.s32 %s185, 1
      %p189 = scmp.eq.s32.totalorder %s20, 1
      %p190 = scmp.ne.s32.totalorder %s185, %s187
      %p191 = scmp.eq.s32.totalorder %s20, 0
      %p192 = por %p190, %p191
      %p193 = scmp.ne.s32.totalorder %s185, %s187
      %p194 = scmp.eq.s32.totalorder %s25, 1
      %p195 = por %p193, %p194
      %p196 = scmp.ne.s32.totalorder %s187, %s188
      %p197 = scmp.eq.s32.totalorder %s25, 0
      %p198 = por %p196, %p197
      %p199 = scmp.ne.s32.totalorder %s187, %s188
      %p200 = scmp.eq.s32.totalorder %s26, 1
      %p201 = por %p199, %p200
      %p203 = scmp.ne.s32.totalorder %s188, %s202
      %p204 = scmp.eq.s32.totalorder %s26, 0
      %p205 = por %p203, %p204
      %s207 = sadd.s32 %s206, 1
      %p210 = scmp.eq.s32.totalorder %s20, 1
      %p211 = scmp.ne.s32.totalorder %s206, %s208
      %p212 = scmp.eq.s32.totalorder %s20, 0
      %p213 = por %p211, %p212
      %p214 = scmp.ne.s32.totalorder %s206, %s208
      %p215 = scmp.eq.s32.totalorder %s25, 1
      %p216 = por %p214, %p215
      %p217 = scmp.ne.s32.totalorder %s208, %s209
      %p218 = scmp.eq.s32.totalorder %s25, 0
      %p219 = por %p217, %p218
      %p220 = scmp.ne.s32.totalorder %s208, %s209
      %p221 = scmp.eq.s32.totalorder %s26, 1
      %p222 = por %p220, %p221
      %p224 = scmp.ne.s32.totalorder %s209, %s223
      %p225 = scmp.eq.s32.totalorder %s26, 0
      %p226 = por %p224, %p225
      %s227 = ssub.s32 %s20, %s27
      %p228 = scmp.eq.s32.totalorder %s227, 0
      %s230 = sadd.s32 %s229, 1
      %s231 = scalar_select %p228, %s229, %s230
      %p234 = pneg %p228
      %p235 = scmp.eq.s32.totalorder %s20, 1
      %p236 = por %p234, %p235
      %p237 = scmp.ne.s32.totalorder %s229, %s232
      %p238 = scmp.eq.s32.totalorder %s20, 0
      %p239 = por %p237, %p238
      %p240 = scmp.ne.s32.totalorder %s229, %s232
      %p241 = scmp.eq.s32.totalorder %s25, 1
      %p242 = por %p240, %p241
      %p243 = scmp.ne.s32.totalorder %s232, %s233
      %p244 = scmp.eq.s32.totalorder %s25, 0
      %p245 = por %p243, %p244
      %p246 = scmp.ne.s32.totalorder %s232, %s233
      %p247 = scmp.eq.s32.totalorder %s26, 1
      %p248 = por %p246, %p247
      %p250 = scmp.ne.s32.totalorder %s233, %s249
      %p251 = scmp.eq.s32.totalorder %s26, 0
      %p252 = por %p250, %p251
      %p253 = scmp.le.s32.totalorder 1, %s20
      %p254 = scmp.lt.s32.totalorder %s20, 3
      %p255 = pnand %p253, %p254
      %p256 = pneg %p255
      // Predicated region
      $region9: #{critic_forward.1} parent=5 // pred_check
        _
      $region10: #{critic_forward.1} parent=5 // pred_check_branch
        %258 = sbr.rel (%p255) target = $region12
      $region11: #{critic_forward.1} parent=5 // pred_region
        %s259 = ssub.s32 %s20, 1
        // Predicated region
        $region13: #{critic_forward.1} parent=11 // pred_check
          %p260 = pneg %p93
        $region14: #{critic_forward.1} parent=11 // pred_check_branch
          %262 = sbr.rel (%p260) target = $region16
        $region15: #{critic_forward.1} parent=11 // pred_region
          _
        $region16: #{critic_forward.1} parent=11 // pred_fallthru
          _
        // Predicated region
        $region17: #{critic_forward.1} parent=11 // pred_check
          %p263 = pneg %p114
        $region18: #{critic_forward.1} parent=11 // pred_check_branch
          %265 = sbr.rel (%p263) target = $region20
        $region19: #{critic_forward.1} parent=11 // pred_region
          _
        $region20: #{critic_forward.1} parent=11 // pred_fallthru
          _
        // Predicated region
        $region21: #{critic_forward.1} parent=11 // pred_check
          %p266 = pneg %p135
        $region22: #{critic_forward.1} parent=11 // pred_check_branch
          %268 = sbr.rel (%p266) target = $region24
        $region23: #{critic_forward.1} parent=11 // pred_region
          _
        $region24: #{critic_forward.1} parent=11 // pred_fallthru
          _
        // Predicated region
        $region25: #{critic_forward.1} parent=11 // pred_check
          %p269 = pneg %p156
        $region26: #{critic_forward.1} parent=11 // pred_check_branch
          %271 = sbr.rel (%p269) target = $region28
        $region27: #{critic_forward.1} parent=11 // pred_region
          _
        $region28: #{critic_forward.1} parent=11 // pred_fallthru
          _
        // Predicated region
        $region29: #{critic_forward.1} parent=11 // pred_check
          %p272 = pneg %p177
        $region30: #{critic_forward.1} parent=11 // pred_check_branch
          %274 = sbr.rel (%p272) target = $region32
        $region31: #{critic_forward.1} parent=11 // pred_region
          _
        $region32: #{critic_forward.1} parent=11 // pred_fallthru
          _
        // Predicated region
        $region33: #{critic_forward.1} parent=11 // pred_check
          %p275 = pneg %p198
        $region34: #{critic_forward.1} parent=11 // pred_check_branch
          %277 = sbr.rel (%p275) target = $region36
        $region35: #{critic_forward.1} parent=11 // pred_region
          _
        $region36: #{critic_forward.1} parent=11 // pred_fallthru
          _
        // Predicated region
        $region37: #{critic_forward.1} parent=11 // pred_check
          %p278 = pneg %p219
        $region38: #{critic_forward.1} parent=11 // pred_check_branch
          %280 = sbr.rel (%p278) target = $region40
        $region39: #{critic_forward.1} parent=11 // pred_region
          _
        $region40: #{critic_forward.1} parent=11 // pred_fallthru
          _
      $region12: #{critic_forward.1} parent=5 // pred_fallthru
        _
      %p281 = scmp.lt.s32.totalorder %s20, 2
      // Predicated region
      $region41: #{critic_forward.1} parent=5 // pred_check
        %p282 = pneg %p281
      $region42: #{critic_forward.1} parent=5 // pred_check_branch
        %284 = sbr.rel (%p282) target = $region44
      $region43: #{critic_forward.1} parent=5 // pred_region
        // Predicated region
        $region45: #{critic_forward.1} parent=43 // pred_check
          %p285 = pneg %p40
        $region46: #{critic_forward.1} parent=43 // pred_check_branch
          %287 = sbr.rel (%p285) target = $region48
        $region47: #{critic_forward.1} parent=43 // pred_region
          %s288 = smul.u32 16, %s20
          %p289 = scmp.lt.s32.totalorder %s288, 31
          %s290 = scalar_select %p289, %s288, 31
          %s291 = smul.addr %s290, 8
          %s292 = scalar_lea.vmem %s0, %s291
          %s293 = smul.u32 16, %s20
        $region48: #{critic_forward.1} parent=43 // pred_fallthru
          _
        // Predicated region
        $region49: #{critic_forward.1} parent=43 // pred_check
          %p294 = pneg %p66
        $region50: #{critic_forward.1} parent=43 // pred_check_branch
          %296 = sbr.rel (%p294) target = $region52
        $region51: #{critic_forward.1} parent=43 // pred_region
          %s297 = smul.u32 16, %s20
          %p298 = scmp.lt.s32.totalorder %s297, 31
          %s299 = scalar_select %p298, %s297, 31
          %s300 = smul.addr %s299, 8
          %s301 = scalar_lea.vmem %s1, %s300
          %s302 = smul.u32 16, %s20
        $region52: #{critic_forward.1} parent=43 // pred_fallthru
          _
      $region44: #{critic_forward.1} parent=5 // pred_fallthru
        _
      %p303 = scmp.le.s32.totalorder 1, %s20
      %p304 = scmp.lt.s32.totalorder %s20, 3
      %p305 = pnand %p303, %p304
      %p306 = pneg %p305
      // Predicated region
      $region53: #{critic_forward.1} parent=5 // pred_check
        _
      $region54: #{critic_forward.1} parent=5 // pred_check_branch
        %308 = sbr.rel (%p305) target = $region56
      $region55: #{critic_forward.1} parent=5 // pred_region
        %s309 = ssub.s32 %s20, 1
        %s310 = smul.u32 16, %s25
        %p311 = scmp.lt.s32.totalorder %s310, 31
        %s312 = scalar_select %p311, %s310, 31
        %s313 = smul.addr %s312, 8
        %s314 = scalar_lea.vmem %s0, %s313
        %p315 = pneg %p46
        %p316 = pneg %p43
        %s317 = smul.u32 16, %s25
        %p318 = scmp.lt.s32.totalorder %s317, 31
        %s319 = scalar_select %p318, %s317, 31
        %s320 = smul.addr %s319, 8
        %s321 = scalar_lea.vmem %s1, %s320
        %p322 = pneg %p72
        %p323 = pneg %p69
        %p324 = pneg %p93
        %p325 = pneg %p90
        %p326 = pneg %p114
        %p327 = pneg %p111
        %p328 = pneg %p135
        %p329 = pneg %p132
        %p330 = pneg %p156
        %p331 = pneg %p153
        %p332 = pneg %p177
        %p333 = pneg %p174
        %p334 = pneg %p198
        %p335 = pneg %p195
        %p336 = pneg %p219
        %p337 = pneg %p216
        %p338 = pneg %p245
        %p339 = pneg %p242
        %s340 = sand.u32 %s232, 1
        %s341 = scalar_lea.sflag [#allocation4], %s340
        %s342 = sand.u32 %s232, 1
        %s343 = scalar_lea.vmem [#allocation3], %s342
        %s344 = smul.u32 16, %s25
        %p345 = scmp.lt.s32.totalorder %s344, 31
        %s346 = scalar_select %p345, %s344, 31
        %s347 = smul.addr %s346, 8
        %s348 = scalar_lea.vmem %s0, %s347
        %s349 = smul.u32 16, %s25
        %s350 = smul.u32 16, %s25
        %p351 = scmp.lt.s32.totalorder %s350, 31
        %s352 = scalar_select %p351, %s350, 31
        %s353 = smul.addr %s352, 8
        %s354 = scalar_lea.vmem %s1, %s353
        %s355 = smul.u32 16, %s25
        %v356 = vld [vmem:[%s348] sm:$0xff]
        %v357 = vld [vmem:[%s348 + $0x8] sm:$0xff]
        %v358 = vld [vmem:[%s348 + $0x10] sm:$0xff]
        %v359 = vld [vmem:[%s348 + $0x18] sm:$0xff]
        %v360 = vld [vmem:[%s348 + $0x20] sm:$0xff]
        %v361 = vld [vmem:[%s348 + $0x28] sm:$0xff]
        %v362 = vld [vmem:[%s348 + $0x30] sm:$0xff]
        %v363 = vld [vmem:[%s348 + $0x38] sm:$0xff]
        %v364 = vld [vmem:[%s348 + $0x40] sm:$0xff]
        %v365 = vld [vmem:[%s348 + $0x48] sm:$0xff]
        %v366 = vld [vmem:[%s348 + $0x50] sm:$0xff]
        %v367 = vld [vmem:[%s348 + $0x58] sm:$0xff]
        %v368 = vld [vmem:[%s348 + $0x60] sm:$0xff]
        %v369 = vld [vmem:[%s348 + $0x68] sm:$0xff]
        %v370 = vld [vmem:[%s348 + $0x70] sm:$0xff]
        %v371 = vld [vmem:[%s348 + $0x78] sm:$0xff]
        %v372 = vld [vmem:[%s2] sm:$0xff]
        %v373 = vld [vmem:[%s2 + $0x8] sm:$0xff]
        %v374 = vld [vmem:[%s2 + $0x10] sm:$0xff]
        %v375 = vld [vmem:[%s2 + $0x18] sm:$0xff]
        %v376 = vld [vmem:[%s2 + $0x20] sm:$0xff]
        %v377 = vld [vmem:[%s2 + $0x28] sm:$0xff]
        %v378 = vld [vmem:[%s2 + $0x30] sm:$0xff]
        %v379 = vld [vmem:[%s2 + $0x38] sm:$0xff]
        %v380 = vld [vmem:[%s2 + $0x40] sm:$0xff]
        %v381 = vld [vmem:[%s2 + $0x48] sm:$0xff]
        %v382 = vld [vmem:[%s2 + $0x50] sm:$0xff]
        %v383 = vld [vmem:[%s2 + $0x58] sm:$0xff]
        %v384 = vld [vmem:[%s3] sm:$0x3]
        %v386 = vlaneseq
        %v387 = vshrl.u32 %v386, 7
        %v388 = vsub.s32 0, %v387
        %v389 = vrot.slane %v384, %v388
        %v390 = vlaneseq
        %v391 = vshrl.u32 %v390, 7
        %v392 = vsub.s32 1, %v391
        %v393 = vrot.slane %v384, %v392
        %vm396 = vcmask 392192
        %v398 = vsel %vm396, %v356, 0
        %v401 = vsel %vm396, %v357, 0
        %v404 = vsel %vm396, %v358, 0
        %v407 = vsel %vm396, %v359, 0
        %v410 = vsel %vm396, %v360, 0
        %v413 = vsel %vm396, %v361, 0
        %v416 = vsel %vm396, %v362, 0
        %v419 = vsel %vm396, %v363, 0
        %v422 = vsel %vm396, %v364, 0
        %v425 = vsel %vm396, %v365, 0
        %v428 = vsel %vm396, %v366, 0
        %v431 = vsel %vm396, %v367, 0
        %v434 = vsel %vm396, %v368, 0
        %v437 = vsel %vm396, %v369, 0
        %v440 = vsel %vm396, %v370, 0
        %v443 = vsel %vm396, %v371, 0
        %445 = vmatprep.subr.mxu0 %v373
        %446 = vmatpush1.msra.mxu0 %v372
        %447 = vmatprep.subr.mxu0 %v375
        %448 = vmatpush1.msra.mxu0 %v374
        %449 = vmatprep.subr.mxu0 %v377
        %450 = vmatpush1.msra.mxu0 %v376
        %451 = vmatprep.subr.mxu0 %v379
        %452 = vmatpush1.msra.mxu0 %v378
        %453 = vmatprep.subr.mxu0 %v381
        %454 = vmatpush1.msra.mxu0 %v380
        %455 = vmatprep.subr.mxu0 %v383
        %456 = vmatpush1.msra.mxu0 %v382
        %457 = vmatprep.subr.mxu0 0.0
        %458 = vmatpush1.msra.mxu0 0.0
        %459 = vmatprep.subr.mxu0 0.0
        %460 = vmatpush1.msra.mxu0 0.0
        %461 = vmatprep.subr.mxu0 0.0
        %462 = vmatpush1.msra.mxu0 0.0
        %463 = vmatprep.subr.mxu0 0.0
        %464 = vmatpush1.msra.mxu0 0.0
        %465 = vmatprep.subr.mxu0 0.0
        %466 = vmatpush1.msra.mxu0 0.0
        %467 = vmatprep.subr.mxu0 0.0
        %468 = vmatpush1.msra.mxu0 0.0
        %469 = vmatprep.subr.mxu0 0.0
        %470 = vmatpush1.msra.mxu0 0.0
        %471 = vmatprep.subr.mxu0 0.0
        %472 = vmatpush1.msra.mxu0 0.0
        %473 = vmatprep.subr.mxu0 0.0
        %474 = vmatpush1.msra.mxu0 0.0
        %475 = vmatprep.subr.mxu0 0.0
        %476 = vmatpush1.msra.mxu0 0.0
        %477 = vmatprep.subr.mxu0 0.0
        %478 = vmatpush1.msra.mxu0 0.0
        %479 = vmatprep.subr.mxu0 0.0
        %480 = vmatpush1.msra.mxu0 0.0
        %481 = vmatprep.subr.mxu0 0.0
        %482 = vmatpush1.msra.mxu0 0.0
        %483 = vmatprep.subr.mxu0 0.0
        %484 = vmatpush1.msra.mxu0 0.0
        %485 = vmatprep.subr.mxu0 0.0
        %486 = vmatpush1.msra.mxu0 0.0
        %487 = vmatprep.subr.mxu0 0.0
        %488 = vmatpush1.msra.mxu0 0.0
        %489 = vmatprep.subr.mxu0 0.0
        %490 = vmatpush1.msra.mxu0 0.0
        %491 = vmatprep.subr.mxu0 0.0
        %492 = vmatpush1.msra.mxu0 0.0
        %493 = vmatprep.subr.mxu0 0.0
        %494 = vmatpush1.msra.mxu0 0.0
        %495 = vmatprep.subr.mxu0 0.0
        %496 = vmatpush1.msra.mxu0 0.0
        %497 = vmatprep.subr.mxu0 0.0
        %498 = vmatpush1.msra.mxu0 0.0
        %499 = vmatprep.subr.mxu0 0.0
        %500 = vmatpush1.msra.mxu0 0.0
        %501 = vmatprep.subr.mxu0 0.0
        %502 = vmatpush1.msra.mxu0 0.0
        %503 = vmatprep.subr.mxu0 0.0
        %504 = vmatpush1.msra.mxu0 0.0
        %505 = vmatprep.subr.mxu0 0.0
        %506 = vmatpush1.msra.mxu0 0.0
        %507 = vmatprep.subr.mxu0 0.0
        %508 = vmatpush1.msra.mxu0 0.0
        %509 = vmatprep.mubr.f32.mxu0 0.0
        %510 = vmatmul.mubr.f32.gmra.mrb[0].mxu0 %v398
        %v511 = vpop.f32.mrb[0].mxu0
        %v512 = vadd.f32 %v389, %v511
        %v513 = vpop.f32.mrb[0].mxu0
        %v514 = vadd.f32 %v393, %v513
        %515 = vmatprep.mubr.f32.mxu0 0.0
        %516 = vmatmul.mubr.f32.gmra.mrb[0].mxu0 %v401
        %v517 = vpop.f32.mrb[0].mxu0
        %v518 = vadd.f32 %v389, %v517
        %v519 = vpop.f32.mrb[0].mxu0
        %v520 = vadd.f32 %v393, %v519
        %521 = vmatprep.mubr.f32.mxu0 0.0
        %522 = vmatmul.mubr.f32.gmra.mrb[0].mxu0 %v404
        %v523 = vpop.f32.mrb[0].mxu0
        %v524 = vadd.f32 %v389, %v523
        %v525 = vpop.f32.mrb[0].mxu0
        %v526 = vadd.f32 %v393, %v525
        %527 = vmatprep.mubr.f32.mxu0 0.0
        %528 = vmatmul.mubr.f32.gmra.mrb[0].mxu0 %v407
        %v529 = vpop.f32.mrb[0].mxu0
        %v530 = vadd.f32 %v389, %v529
        %v531 = vpop.f32.mrb[0].mxu0
        %v532 = vadd.f32 %v393, %v531
        %533 = vmatprep.mubr.f32.mxu0 0.0
        %534 = vmatmul.mubr.f32.gmra.mrb[0].mxu0 %v410
        %v535 = vpop.f32.mrb[0].mxu0
        %v536 = vadd.f32 %v389, %v535
        %v537 = vpop.f32.mrb[0].mxu0
        %v538 = vadd.f32 %v393, %v537
        %539 = vmatprep.mubr.f32.mxu0 0.0
        %540 = vmatmul.mubr.f32.gmra.mrb[0].mxu0 %v413
        %v541 = vpop.f32.mrb[0].mxu0
        %v542 = vadd.f32 %v389, %v541
        %v543 = vpop.f32.mrb[0].mxu0
        %v544 = vadd.f32 %v393, %v543
        %545 = vmatprep.mubr.f32.mxu0 0.0
        %546 = vmatmul.mubr.f32.gmra.mrb[0].mxu0 %v416
        %v547 = vpop.f32.mrb[0].mxu0
        %v548 = vadd.f32 %v389, %v547
        %v549 = vpop.f32.mrb[0].mxu0
        %v550 = vadd.f32 %v393, %v549
        %551 = vmatprep.mubr.f32.mxu0 0.0
        %552 = vmatmul.mubr.f32.gmra.mrb[0].mxu0 %v419
        %v553 = vpop.f32.mrb[0].mxu0
        %v554 = vadd.f32 %v389, %v553
        %v555 = vpop.f32.mrb[0].mxu0
        %v556 = vadd.f32 %v393, %v555
        %557 = vmatprep.mubr.f32.mxu0 0.0
        %558 = vmatmul.mubr.f32.gmra.mrb[0].mxu0 %v422
        %v559 = vpop.f32.mrb[0].mxu0
        %v560 = vadd.f32 %v389, %v559
        %v561 = vpop.f32.mrb[0].mxu0
        %v562 = vadd.f32 %v393, %v561
        %563 = vmatprep.mubr.f32.mxu0 0.0
        %564 = vmatmul.mubr.f32.gmra.mrb[0].mxu0 %v425
        %v565 = vpop.f32.mrb[0].mxu0
        %v566 = vadd.f32 %v389, %v565
        %v567 = vpop.f32.mrb[0].mxu0
        %v568 = vadd.f32 %v393, %v567
        %569 = vmatprep.mubr.f32.mxu0 0.0
        %570 = vmatmul.mubr.f32.gmra.mrb[0].mxu0 %v428
        %v571 = vpop.f32.mrb[0].mxu0
        %v572 = vadd.f32 %v389, %v571
        %v573 = vpop.f32.mrb[0].mxu0
        %v574 = vadd.f32 %v393, %v573
        %575 = vmatprep.mubr.f32.mxu0 0.0
        %576 = vmatmul.mubr.f32.gmra.mrb[0].mxu0 %v431
        %v577 = vpop.f32.mrb[0].mxu0
        %v578 = vadd.f32 %v389, %v577
        %v579 = vpop.f32.mrb[0].mxu0
        %v580 = vadd.f32 %v393, %v579
        %581 = vmatprep.mubr.f32.mxu0 0.0
        %582 = vmatmul.mubr.f32.gmra.mrb[0].mxu0 %v434
        %v583 = vpop.f32.mrb[0].mxu0
        %v584 = vadd.f32 %v389, %v583
        %v585 = vpop.f32.mrb[0].mxu0
        %v586 = vadd.f32 %v393, %v585
        %587 = vmatprep.mubr.f32.mxu0 0.0
        %588 = vmatmul.mubr.f32.gmra.mrb[0].mxu0 %v437
        %v589 = vpop.f32.mrb[0].mxu0
        %v590 = vadd.f32 %v389, %v589
        %v591 = vpop.f32.mrb[0].mxu0
        %v592 = vadd.f32 %v393, %v591
        %593 = vmatprep.mubr.f32.mxu0 0.0
        %594 = vmatmul.mubr.f32.gmra.mrb[0].mxu0 %v440
        %v595 = vpop.f32.mrb[0].mxu0
        %v596 = vadd.f32 %v389, %v595
        %v597 = vpop.f32.mrb[0].mxu0
        %v598 = vadd.f32 %v393, %v597
        %599 = vmatprep.mubr.f32.mxu0 0.0
        %600 = vmatmul.mubr.f32.gmra.mrb[0].mxu0 %v443
        %v601 = vpop.f32.mrb[0].mxu0
        %v602 = vadd.f32 %v389, %v601
        %v603 = vpop.f32.mrb[0].mxu0
        %v604 = vadd.f32 %v393, %v603
        %605 = vdwg.mxu0
        %v606 = vmax.f32 %v512, 0.0
        %v607 = vmax.f32 %v514, 0.0
        %v608 = vmax.f32 %v518, 0.0
        %v609 = vmax.f32 %v520, 0.0
        %v610 = vmax.f32 %v524, 0.0
        %v611 = vmax.f32 %v526, 0.0
        %v612 = vmax.f32 %v530, 0.0
        %v613 = vmax.f32 %v532, 0.0
        %v614 = vmax.f32 %v536, 0.0
        %v615 = vmax.f32 %v538, 0.0
        %v616 = vmax.f32 %v542, 0.0
        %v617 = vmax.f32 %v544, 0.0
        %v618 = vmax.f32 %v548, 0.0
        %v619 = vmax.f32 %v550, 0.0
        %v620 = vmax.f32 %v554, 0.0
        %v621 = vmax.f32 %v556, 0.0
        %v622 = vmax.f32 %v560, 0.0
        %v623 = vmax.f32 %v562, 0.0
        %v624 = vmax.f32 %v566, 0.0
        %v625 = vmax.f32 %v568, 0.0
        %v626 = vmax.f32 %v572, 0.0
        %v627 = vmax.f32 %v574, 0.0
        %v628 = vmax.f32 %v578, 0.0
        %v629 = vmax.f32 %v580, 0.0
        %v630 = vmax.f32 %v584, 0.0
        %v631 = vmax.f32 %v586, 0.0
        %v632 = vmax.f32 %v590, 0.0
        %v633 = vmax.f32 %v592, 0.0
        %v634 = vmax.f32 %v596, 0.0
        %v635 = vmax.f32 %v598, 0.0
        %v636 = vmax.f32 %v602, 0.0
        %v637 = vmax.f32 %v604, 0.0
        %v638 = vld [vmem:[%s4] sm:$0xff]
        %v639 = vld [vmem:[%s4 + $0x8] sm:$0xff]
        %v640 = vld [vmem:[%s4 + $0x10] sm:$0xff]
        %v641 = vld [vmem:[%s4 + $0x18] sm:$0xff]
        %v642 = vld [vmem:[%s4 + $0x20] sm:$0xff]
        %v643 = vld [vmem:[%s4 + $0x28] sm:$0xff]
        %v644 = vld [vmem:[%s4 + $0x30] sm:$0xff]
        %v645 = vld [vmem:[%s4 + $0x38] sm:$0xff]
        %v646 = vld [vmem:[%s4 + $0x40] sm:$0xff]
        %v647 = vld [vmem:[%s4 + $0x48] sm:$0xff]
        %v648 = vld [vmem:[%s4 + $0x50] sm:$0xff]
        %v649 = vld [vmem:[%s4 + $0x58] sm:$0xff]
        %v650 = vld [vmem:[%s4 + $0x60] sm:$0xff]
        %v651 = vld [vmem:[%s4 + $0x68] sm:$0xff]
        %v652 = vld [vmem:[%s4 + $0x70] sm:$0xff]
        %v653 = vld [vmem:[%s4 + $0x78] sm:$0xff]
        %v654 = vld [vmem:[%s4 + $0x80] sm:$0xff]
        %v655 = vld [vmem:[%s4 + $0x88] sm:$0xff]
        %v656 = vld [vmem:[%s4 + $0x90] sm:$0xff]
        %v657 = vld [vmem:[%s4 + $0x98] sm:$0xff]
        %v658 = vld [vmem:[%s4 + $0xa0] sm:$0xff]
        %v659 = vld [vmem:[%s4 + $0xa8] sm:$0xff]
        %v660 = vld [vmem:[%s4 + $0xb0] sm:$0xff]
        %v661 = vld [vmem:[%s4 + $0xb8] sm:$0xff]
        %v662 = vld [vmem:[%s4 + $0xc0] sm:$0xff]
        %v663 = vld [vmem:[%s4 + $0xc8] sm:$0xff]
        %v664 = vld [vmem:[%s4 + $0xd0] sm:$0xff]
        %v665 = vld [vmem:[%s4 + $0xd8] sm:$0xff]
        %v666 = vld [vmem:[%s4 + $0xe0] sm:$0xff]
        %v667 = vld [vmem:[%s4 + $0xe8] sm:$0xff]
        %v668 = vld [vmem:[%s4 + $0xf0] sm:$0xff]
        %v669 = vld [vmem:[%s4 + $0xf8] sm:$0xff]
        %v670 = vld [vmem:[%s4 + $0x100] sm:$0xff]
        %v671 = vld [vmem:[%s4 + $0x108] sm:$0xff]
        %v672 = vld [vmem:[%s4 + $0x110] sm:$0xff]
        %v673 = vld [vmem:[%s4 + $0x118] sm:$0xff]
        %v674 = vld [vmem:[%s4 + $0x120] sm:$0xff]
        %v675 = vld [vmem:[%s4 + $0x128] sm:$0xff]
        %v676 = vld [vmem:[%s4 + $0x130] sm:$0xff]
        %v677 = vld [vmem:[%s4 + $0x138] sm:$0xff]
        %v678 = vld [vmem:[%s4 + $0x140] sm:$0xff]
        %v679 = vld [vmem:[%s4 + $0x148] sm:$0xff]
        %v680 = vld [vmem:[%s4 + $0x150] sm:$0xff]
        %v681 = vld [vmem:[%s4 + $0x158] sm:$0xff]
        %v682 = vld [vmem:[%s4 + $0x160] sm:$0xff]
        %v683 = vld [vmem:[%s4 + $0x168] sm:$0xff]
        %v684 = vld [vmem:[%s4 + $0x170] sm:$0xff]
        %v685 = vld [vmem:[%s4 + $0x178] sm:$0xff]
        %v686 = vld [vmem:[%s4 + $0x180] sm:$0xff]
        %v687 = vld [vmem:[%s4 + $0x188] sm:$0xff]
        %v688 = vld [vmem:[%s4 + $0x190] sm:$0xff]
        %v689 = vld [vmem:[%s4 + $0x198] sm:$0xff]
        %v690 = vld [vmem:[%s4 + $0x1a0] sm:$0xff]
        %v691 = vld [vmem:[%s4 + $0x1a8] sm:$0xff]
        %v692 = vld [vmem:[%s4 + $0x1b0] sm:$0xff]
        %v693 = vld [vmem:[%s4 + $0x1b8] sm:$0xff]
        %v694 = vld [vmem:[%s4 + $0x1c0] sm:$0xff]
        %v695 = vld [vmem:[%s4 + $0x1c8] sm:$0xff]
        %v696 = vld [vmem:[%s4 + $0x1d0] sm:$0xff]
        %v697 = vld [vmem:[%s4 + $0x1d8] sm:$0xff]
        %v698 = vld [vmem:[%s4 + $0x1e0] sm:$0xff]
        %v699 = vld [vmem:[%s4 + $0x1e8] sm:$0xff]
        %v700 = vld [vmem:[%s4 + $0x1f0] sm:$0xff]
        %v701 = vld [vmem:[%s4 + $0x1f8] sm:$0xff]
        %v702 = vld [vmem:[%s6] sm:$0x3]
        %v704 = vlaneseq
        %v705 = vshrl.u32 %v704, 7
        %v706 = vsub.s32 0, %v705
        %v707 = vrot.slane %v702, %v706
        %v708 = vlaneseq
        %v709 = vshrl.u32 %v708, 7
        %v710 = vsub.s32 1, %v709
        %v711 = vrot.slane %v702, %v710
        %714 = vmatprep.subr.mxu0 %v639
        %715 = vmatpush1.msra.mxu0 %v638
        %716 = vmatprep.subr.mxu0 %v641
        %717 = vmatpush1.msra.mxu0 %v640
        %718 = vmatprep.subr.mxu0 %v643
        %719 = vmatpush1.msra.mxu0 %v642
        %720 = vmatprep.subr.mxu0 %v645
        %721 = vmatpush1.msra.mxu0 %v644
        %722 = vmatprep.subr.mxu0 %v647
        %723 = vmatpush1.msra.mxu0 %v646
        %724 = vmatprep.subr.mxu0 %v649
        %725 = vmatpush1.msra.mxu0 %v648
        %726 = vmatprep.subr.mxu0 %v651
        %727 = vmatpush1.msra.mxu0 %v650
        %728 = vmatprep.subr.mxu0 %v653
        %729 = vmatpush1.msra.mxu0 %v652
        %730 = vmatprep.subr.mxu0 %v655
        %731 = vmatpush1.msra.mxu0 %v654
        %732 = vmatprep.subr.mxu0 %v657
        %733 = vmatpush1.msra.mxu0 %v656
        %734 = vmatprep.subr.mxu0 %v659
        %735 = vmatpush1.msra.mxu0 %v658
        %736 = vmatprep.subr.mxu0 %v661
        %737 = vmatpush1.msra.mxu0 %v660
        %738 = vmatprep.subr.mxu0 %v663
        %739 = vmatpush1.msra.mxu0 %v662
        %740 = vmatprep.subr.mxu0 %v665
        %741 = vmatpush1.msra.mxu0 %v664
        %742 = vmatprep.subr.mxu0 %v667
        %743 = vmatpush1.msra.mxu0 %v666
        %744 = vmatprep.subr.mxu0 %v669
        %745 = vmatpush1.msra.mxu0 %v668
        %746 = vmatprep.subr.mxu0 %v671
        %747 = vmatpush1.msra.mxu0 %v670
        %748 = vmatprep.subr.mxu0 %v673
        %749 = vmatpush1.msra.mxu0 %v672
        %750 = vmatprep.subr.mxu0 %v675
        %751 = vmatpush1.msra.mxu0 %v674
        %752 = vmatprep.subr.mxu0 %v677
        %753 = vmatpush1.msra.mxu0 %v676
        %754 = vmatprep.subr.mxu0 %v679
        %755 = vmatpush1.msra.mxu0 %v678
        %756 = vmatprep.subr.mxu0 %v681
        %757 = vmatpush1.msra.mxu0 %v680
        %758 = vmatprep.subr.mxu0 %v683
        %759 = vmatpush1.msra.mxu0 %v682
        %760 = vmatprep.subr.mxu0 %v685
        %761 = vmatpush1.msra.mxu0 %v684
        %762 = vmatprep.subr.mxu0 %v687
        %763 = vmatpush1.msra.mxu0 %v686
        %764 = vmatprep.subr.mxu0 %v689
        %765 = vmatpush1.msra.mxu0 %v688
        %766 = vmatprep.subr.mxu0 %v691
        %767 = vmatpush1.msra.mxu0 %v690
        %768 = vmatprep.subr.mxu0 %v693
        %769 = vmatpush1.msra.mxu0 %v692
        %770 = vmatprep.subr.mxu0 %v695
        %771 = vmatpush1.msra.mxu0 %v694
        %772 = vmatprep.subr.mxu0 %v697
        %773 = vmatpush1.msra.mxu0 %v696
        %774 = vmatprep.subr.mxu0 %v699
        %775 = vmatpush1.msra.mxu0 %v698
        %776 = vmatprep.subr.mxu0 %v701
        %777 = vmatpush1.msra.mxu0 %v700
        %778 = vmatprep.mubr.f32.mxu0 %v607
        %779 = vmatmul.mubr.f32.gmra.mrb[0].mxu0 %v606
        %v780 = vpop.f32.mrb[0].mxu0
        %v781 = vadd.f32 %v707, %v780
        %v782 = vpop.f32.mrb[0].mxu0
        %v783 = vadd.f32 %v711, %v782
        %784 = vmatprep.mubr.f32.mxu0 %v609
        %785 = vmatmul.mubr.f32.gmra.mrb[0].mxu0 %v608
        %v786 = vpop.f32.mrb[0].mxu0
        %v787 = vadd.f32 %v707, %v786
        %v788 = vpop.f32.mrb[0].mxu0
        %v789 = vadd.f32 %v711, %v788
        %790 = vmatprep.mubr.f32.mxu0 %v611
        %791 = vmatmul.mubr.f32.gmra.mrb[0].mxu0 %v610
        %v792 = vpop.f32.mrb[0].mxu0
        %v793 = vadd.f32 %v707, %v792
        %v794 = vpop.f32.mrb[0].mxu0
        %v795 = vadd.f32 %v711, %v794
        %796 = vmatprep.mubr.f32.mxu0 %v613
        %797 = vmatmul.mubr.f32.gmra.mrb[0].mxu0 %v612
        %v798 = vpop.f32.mrb[0].mxu0
        %v799 = vadd.f32 %v707, %v798
        %v800 = vpop.f32.mrb[0].mxu0
        %v801 = vadd.f32 %v711, %v800
        %802 = vmatprep.mubr.f32.mxu0 %v615
        %803 = vmatmul.mubr.f32.gmra.mrb[0].mxu0 %v614
        %v804 = vpop.f32.mrb[0].mxu0
        %v805 = vadd.f32 %v707, %v804
        %v806 = vpop.f32.mrb[0].mxu0
        %v807 = vadd.f32 %v711, %v806
        %808 = vmatprep.mubr.f32.mxu0 %v617
        %809 = vmatmul.mubr.f32.gmra.mrb[0].mxu0 %v616
        %v810 = vpop.f32.mrb[0].mxu0
        %v811 = vadd.f32 %v707, %v810
        %v812 = vpop.f32.mrb[0].mxu0
        %v813 = vadd.f32 %v711, %v812
        %814 = vmatprep.mubr.f32.mxu0 %v619
        %815 = vmatmul.mubr.f32.gmra.mrb[0].mxu0 %v618
        %v816 = vpop.f32.mrb[0].mxu0
        %v817 = vadd.f32 %v707, %v816
        %v818 = vpop.f32.mrb[0].mxu0
        %v819 = vadd.f32 %v711, %v818
        %820 = vmatprep.mubr.f32.mxu0 %v621
        %821 = vmatmul.mubr.f32.gmra.mrb[0].mxu0 %v620
        %v822 = vpop.f32.mrb[0].mxu0
        %v823 = vadd.f32 %v707, %v822
        %v824 = vpop.f32.mrb[0].mxu0
        %v825 = vadd.f32 %v711, %v824
        %826 = vmatprep.mubr.f32.mxu0 %v623
        %827 = vmatmul.mubr.f32.gmra.mrb[0].mxu0 %v622
        %v828 = vpop.f32.mrb[0].mxu0
        %v829 = vadd.f32 %v707, %v828
        %v830 = vpop.f32.mrb[0].mxu0
        %v831 = vadd.f32 %v711, %v830
        %832 = vmatprep.mubr.f32.mxu0 %v625
        %833 = vmatmul.mubr.f32.gmra.mrb[0].mxu0 %v624
        %v834 = vpop.f32.mrb[0].mxu0
        %v835 = vadd.f32 %v707, %v834
        %v836 = vpop.f32.mrb[0].mxu0
        %v837 = vadd.f32 %v711, %v836
        %838 = vmatprep.mubr.f32.mxu0 %v627
        %839 = vmatmul.mubr.f32.gmra.mrb[0].mxu0 %v626
        %v840 = vpop.f32.mrb[0].mxu0
        %v841 = vadd.f32 %v707, %v840
        %v842 = vpop.f32.mrb[0].mxu0
        %v843 = vadd.f32 %v711, %v842
        %844 = vmatprep.mubr.f32.mxu0 %v629
        %845 = vmatmul.mubr.f32.gmra.mrb[0].mxu0 %v628
        %v846 = vpop.f32.mrb[0].mxu0
        %v847 = vadd.f32 %v707, %v846
        %v848 = vpop.f32.mrb[0].mxu0
        %v849 = vadd.f32 %v711, %v848
        %850 = vmatprep.mubr.f32.mxu0 %v631
        %851 = vmatmul.mubr.f32.gmra.mrb[0].mxu0 %v630
        %v852 = vpop.f32.mrb[0].mxu0
        %v853 = vadd.f32 %v707, %v852
        %v854 = vpop.f32.mrb[0].mxu0
        %v855 = vadd.f32 %v711, %v854
        %856 = vmatprep.mubr.f32.mxu0 %v633
        %857 = vmatmul.mubr.f32.gmra.mrb[0].mxu0 %v632
        %v858 = vpop.f32.mrb[0].mxu0
        %v859 = vadd.f32 %v707, %v858
        %v860 = vpop.f32.mrb[0].mxu0
        %v861 = vadd.f32 %v711, %v860
        %862 = vmatprep.mubr.f32.mxu0 %v635
        %863 = vmatmul.mubr.f32.gmra.mrb[0].mxu0 %v634
        %v864 = vpop.f32.mrb[0].mxu0
        %v865 = vadd.f32 %v707, %v864
        %v866 = vpop.f32.mrb[0].mxu0
        %v867 = vadd.f32 %v711, %v866
        %868 = vmatprep.mubr.f32.mxu0 %v637
        %869 = vmatmul.mubr.f32.gmra.mrb[0].mxu0 %v636
        %v870 = vpop.f32.mrb[0].mxu0
        %v871 = vadd.f32 %v707, %v870
        %v872 = vpop.f32.mrb[0].mxu0
        %v873 = vadd.f32 %v711, %v872
        %874 = vdwg.mxu0
        %v875 = vld [vmem:[%s354] sm:$0xff]
        %v876 = vld [vmem:[%s354 + $0x8] sm:$0xff]
        %v877 = vld [vmem:[%s354 + $0x10] sm:$0xff]
        %v878 = vld [vmem:[%s354 + $0x18] sm:$0xff]
        %v879 = vld [vmem:[%s354 + $0x20] sm:$0xff]
        %v880 = vld [vmem:[%s354 + $0x28] sm:$0xff]
        %v881 = vld [vmem:[%s354 + $0x30] sm:$0xff]
        %v882 = vld [vmem:[%s354 + $0x38] sm:$0xff]
        %v883 = vld [vmem:[%s354 + $0x40] sm:$0xff]
        %v884 = vld [vmem:[%s354 + $0x48] sm:$0xff]
        %v885 = vld [vmem:[%s354 + $0x50] sm:$0xff]
        %v886 = vld [vmem:[%s354 + $0x58] sm:$0xff]
        %v887 = vld [vmem:[%s354 + $0x60] sm:$0xff]
        %v888 = vld [vmem:[%s354 + $0x68] sm:$0xff]
        %v889 = vld [vmem:[%s354 + $0x70] sm:$0xff]
        %v890 = vld [vmem:[%s354 + $0x78] sm:$0xff]
        %v891 = vld [vmem:[%s5] sm:$0xff]
        %893 = vset.pattern.permute.xlu0 0
        %894 = vperm.xlu0 %893, %v875
        %v895 = vpop.permute.xlu0 %894
        %898 = vset.pattern.permute.xlu0 0
        %899 = vperm.xlu0 %898, %v876
        %v900 = vpop.permute.xlu0 %899
        %903 = vset.pattern.permute.xlu0 0
        %904 = vperm.xlu0 %903, %v877
        %v905 = vpop.permute.xlu0 %904
        %908 = vset.pattern.permute.xlu0 0
        %909 = vperm.xlu0 %908, %v878
        %v910 = vpop.permute.xlu0 %909
        %913 = vset.pattern.permute.xlu0 0
        %914 = vperm.xlu0 %913, %v879
        %v915 = vpop.permute.xlu0 %914
        %918 = vset.pattern.permute.xlu0 0
        %919 = vperm.xlu0 %918, %v880
        %v920 = vpop.permute.xlu0 %919
        %923 = vset.pattern.permute.xlu0 0
        %924 = vperm.xlu0 %923, %v881
        %v925 = vpop.permute.xlu0 %924
        %928 = vset.pattern.permute.xlu0 0
        %929 = vperm.xlu0 %928, %v882
        %v930 = vpop.permute.xlu0 %929
        %933 = vset.pattern.permute.xlu0 0
        %934 = vperm.xlu0 %933, %v883
        %v935 = vpop.permute.xlu0 %934
        %938 = vset.pattern.permute.xlu0 0
        %939 = vperm.xlu0 %938, %v884
        %v940 = vpop.permute.xlu0 %939
        %943 = vset.pattern.permute.xlu0 0
        %944 = vperm.xlu0 %943, %v885
        %v945 = vpop.permute.xlu0 %944
        %948 = vset.pattern.permute.xlu0 0
        %949 = vperm.xlu0 %948, %v886
        %v950 = vpop.permute.xlu0 %949
        %953 = vset.pattern.permute.xlu0 0
        %954 = vperm.xlu0 %953, %v887
        %v955 = vpop.permute.xlu0 %954
        %958 = vset.pattern.permute.xlu0 0
        %959 = vperm.xlu0 %958, %v888
        %v960 = vpop.permute.xlu0 %959
        %963 = vset.pattern.permute.xlu0 0
        %964 = vperm.xlu0 %963, %v889
        %v965 = vpop.permute.xlu0 %964
        %968 = vset.pattern.permute.xlu0 0
        %969 = vperm.xlu0 %968, %v890
        %v970 = vpop.permute.xlu0 %969
        %v973 = vlaneseq
        %v974 = vshrl.u32 %v973, 7
        %v975 = vsub.s32 0, %v974
        %v976 = vrot.slane %v891, %v975
        %v977 = vlaneseq
        %v978 = vshrl.u32 %v977, 7
        %v979 = vsub.s32 4, %v978
        %v980 = vrot.slane %v891, %v979
        %v983 = vlaneseq
        %v984 = vshrl.u32 %v983, 7
        %v985 = vsub.s32 0, %v984
        %v986 = vrot.slane %v976, %v985
        %v987 = vlaneseq
        %v988 = vshrl.u32 %v987, 7
        %v989 = vsub.s32 0, %v988
        %v990 = vrot.slane %v980, %v989
        %v991 = vmul.f32 %v895, %v986
        %v992 = vmul.f32 %v895, %v990
        %v993 = vmul.f32 %v900, %v986
        %v994 = vmul.f32 %v900, %v990
        %v995 = vmul.f32 %v905, %v986
        %v996 = vmul.f32 %v905, %v990
        %v997 = vmul.f32 %v910, %v986
        %v998 = vmul.f32 %v910, %v990
        %v999 = vmul.f32 %v915, %v986
        %v1000 = vmul.f32 %v915, %v990
        %v1001 = vmul.f32 %v920, %v986
        %v1002 = vmul.f32 %v920, %v990
        %v1003 = vmul.f32 %v925, %v986
        %v1004 = vmul.f32 %v925, %v990
        %v1005 = vmul.f32 %v930, %v986
        %v1006 = vmul.f32 %v930, %v990
        %v1007 = vmul.f32 %v935, %v986
        %v1008 = vmul.f32 %v935, %v990
        %v1009 = vmul.f32 %v940, %v986
        %v1010 = vmul.f32 %v940, %v990
        %v1011 = vmul.f32 %v945, %v986
        %v1012 = vmul.f32 %v945, %v990
        %v1013 = vmul.f32 %v950, %v986
        %v1014 = vmul.f32 %v950, %v990
        %v1015 = vmul.f32 %v955, %v986
        %v1016 = vmul.f32 %v955, %v990
        %v1017 = vmul.f32 %v960, %v986
        %v1018 = vmul.f32 %v960, %v990
        %v1019 = vmul.f32 %v965, %v986
        %v1020 = vmul.f32 %v965, %v990
        %v1021 = vmul.f32 %v970, %v986
        %v1022 = vmul.f32 %v970, %v990
        %v1023 = vadd.f32 %v781, %v991
        %v1024 = vadd.f32 %v783, %v992
        %v1025 = vadd.f32 %v787, %v993
        %v1026 = vadd.f32 %v789, %v994
        %v1027 = vadd.f32 %v793, %v995
        %v1028 = vadd.f32 %v795, %v996
        %v1029 = vadd.f32 %v799, %v997
        %v1030 = vadd.f32 %v801, %v998
        %v1031 = vadd.f32 %v805, %v999
        %v1032 = vadd.f32 %v807, %v1000
        %v1033 = vadd.f32 %v811, %v1001
        %v1034 = vadd.f32 %v813, %v1002
        %v1035 = vadd.f32 %v817, %v1003
        %v1036 = vadd.f32 %v819, %v1004
        %v1037 = vadd.f32 %v823, %v1005
        %v1038 = vadd.f32 %v825, %v1006
        %v1039 = vadd.f32 %v829, %v1007
        %v1040 = vadd.f32 %v831, %v1008
        %v1041 = vadd.f32 %v835, %v1009
        %v1042 = vadd.f32 %v837, %v1010
        %v1043 = vadd.f32 %v841, %v1011
        %v1044 = vadd.f32 %v843, %v1012
        %v1045 = vadd.f32 %v847, %v1013
        %v1046 = vadd.f32 %v849, %v1014
        %v1047 = vadd.f32 %v853, %v1015
        %v1048 = vadd.f32 %v855, %v1016
        %v1049 = vadd.f32 %v859, %v1017
        %v1050 = vadd.f32 %v861, %v1018
        %v1051 = vadd.f32 %v865, %v1019
        %v1052 = vadd.f32 %v867, %v1020
        %v1053 = vadd.f32 %v871, %v1021
        %v1054 = vadd.f32 %v873, %v1022
        %1055 = vset.pattern.permute.xlu0 1
        %1056 = vperm.xlu0 %1055, %v875
        %v1057 = vpop.permute.xlu0 %1056
        %1059 = vset.pattern.permute.xlu0 1
        %1060 = vperm.xlu0 %1059, %v876
        %v1061 = vpop.permute.xlu0 %1060
        %1063 = vset.pattern.permute.xlu0 1
        %1064 = vperm.xlu0 %1063, %v877
        %v1065 = vpop.permute.xlu0 %1064
        %1067 = vset.pattern.permute.xlu0 1
        %1068 = vperm.xlu0 %1067, %v878
        %v1069 = vpop.permute.xlu0 %1068
        %1071 = vset.pattern.permute.xlu0 1
        %1072 = vperm.xlu0 %1071, %v879
        %v1073 = vpop.permute.xlu0 %1072
        %1075 = vset.pattern.permute.xlu0 1
        %1076 = vperm.xlu0 %1075, %v880
        %v1077 = vpop.permute.xlu0 %1076
        %1079 = vset.pattern.permute.xlu0 1
        %1080 = vperm.xlu0 %1079, %v881
        %v1081 = vpop.permute.xlu0 %1080
        %1083 = vset.pattern.permute.xlu0 1
        %1084 = vperm.xlu0 %1083, %v882
        %v1085 = vpop.permute.xlu0 %1084
        %1087 = vset.pattern.permute.xlu0 1
        %1088 = vperm.xlu0 %1087, %v883
        %v1089 = vpop.permute.xlu0 %1088
        %1091 = vset.pattern.permute.xlu0 1
        %1092 = vperm.xlu0 %1091, %v884
        %v1093 = vpop.permute.xlu0 %1092
        %1095 = vset.pattern.permute.xlu0 1
        %1096 = vperm.xlu0 %1095, %v885
        %v1097 = vpop.permute.xlu0 %1096
        %1099 = vset.pattern.permute.xlu0 1
        %1100 = vperm.xlu0 %1099, %v886
        %v1101 = vpop.permute.xlu0 %1100
        %1103 = vset.pattern.permute.xlu0 1
        %1104 = vperm.xlu0 %1103, %v887
        %v1105 = vpop.permute.xlu0 %1104
        %1107 = vset.pattern.permute.xlu0 1
        %1108 = vperm.xlu0 %1107, %v888
        %v1109 = vpop.permute.xlu0 %1108
        %1111 = vset.pattern.permute.xlu0 1
        %1112 = vperm.xlu0 %1111, %v889
        %v1113 = vpop.permute.xlu0 %1112
        %1115 = vset.pattern.permute.xlu0 1
        %1116 = vperm.xlu0 %1115, %v890
        %v1117 = vpop.permute.xlu0 %1116
        %v1119 = vlaneseq
        %v1120 = vshrl.u32 %v1119, 7
        %v1121 = vsub.s32 1, %v1120
        %v1122 = vrot.slane %v891, %v1121
        %v1123 = vlaneseq
        %v1124 = vshrl.u32 %v1123, 7
        %v1125 = vsub.s32 5, %v1124
        %v1126 = vrot.slane %v891, %v1125
        %v1129 = vlaneseq
        %v1130 = vshrl.u32 %v1129, 7
        %v1131 = vsub.s32 1, %v1130
        %v1132 = vrot.slane %v1122, %v1131
        %v1133 = vlaneseq
        %v1134 = vshrl.u32 %v1133, 7
        %v1135 = vsub.s32 1, %v1134
        %v1136 = vrot.slane %v1126, %v1135
        %v1137 = vmul.f32 %v1057, %v1132
        %v1138 = vmul.f32 %v1057, %v1136
        %v1139 = vmul.f32 %v1061, %v1132
        %v1140 = vmul.f32 %v1061, %v1136
        %v1141 = vmul.f32 %v1065, %v1132
        %v1142 = vmul.f32 %v1065, %v1136
        %v1143 = vmul.f32 %v1069, %v1132
        %v1144 = vmul.f32 %v1069, %v1136
        %v1145 = vmul.f32 %v1073, %v1132
        %v1146 = vmul.f32 %v1073, %v1136
        %v1147 = vmul.f32 %v1077, %v1132
        %v1148 = vmul.f32 %v1077, %v1136
        %v1149 = vmul.f32 %v1081, %v1132
        %v1150 = vmul.f32 %v1081, %v1136
        %v1151 = vmul.f32 %v1085, %v1132
        %v1152 = vmul.f32 %v1085, %v1136
        %v1153 = vmul.f32 %v1089, %v1132
        %v1154 = vmul.f32 %v1089, %v1136
        %v1155 = vmul.f32 %v1093, %v1132
        %v1156 = vmul.f32 %v1093, %v1136
        %v1157 = vmul.f32 %v1097, %v1132
        %v1158 = vmul.f32 %v1097, %v1136
        %v1159 = vmul.f32 %v1101, %v1132
        %v1160 = vmul.f32 %v1101, %v1136
        %v1161 = vmul.f32 %v1105, %v1132
        %v1162 = vmul.f32 %v1105, %v1136
        %v1163 = vmul.f32 %v1109, %v1132
        %v1164 = vmul.f32 %v1109, %v1136
        %v1165 = vmul.f32 %v1113, %v1132
        %v1166 = vmul.f32 %v1113, %v1136
        %v1167 = vmul.f32 %v1117, %v1132
        %v1168 = vmul.f32 %v1117, %v1136
        %v1169 = vadd.f32 %v1023, %v1137
        %v1170 = vadd.f32 %v1024, %v1138
        %v1171 = vadd.f32 %v1025, %v1139
        %v1172 = vadd.f32 %v1026, %v1140
        %v1173 = vadd.f32 %v1027, %v1141
        %v1174 = vadd.f32 %v1028, %v1142
        %v1175 = vadd.f32 %v1029, %v1143
        %v1176 = vadd.f32 %v1030, %v1144
        %v1177 = vadd.f32 %v1031, %v1145
        %v1178 = vadd.f32 %v1032, %v1146
        %v1179 = vadd.f32 %v1033, %v1147
        %v1180 = vadd.f32 %v1034, %v1148
        %v1181 = vadd.f32 %v1035, %v1149
        %v1182 = vadd.f32 %v1036, %v1150
        %v1183 = vadd.f32 %v1037, %v1151
        %v1184 = vadd.f32 %v1038, %v1152
        %v1185 = vadd.f32 %v1039, %v1153
        %v1186 = vadd.f32 %v1040, %v1154
        %v1187 = vadd.f32 %v1041, %v1155
        %v1188 = vadd.f32 %v1042, %v1156
        %v1189 = vadd.f32 %v1043, %v1157
        %v1190 = vadd.f32 %v1044, %v1158
        %v1191 = vadd.f32 %v1045, %v1159
        %v1192 = vadd.f32 %v1046, %v1160
        %v1193 = vadd.f32 %v1047, %v1161
        %v1194 = vadd.f32 %v1048, %v1162
        %v1195 = vadd.f32 %v1049, %v1163
        %v1196 = vadd.f32 %v1050, %v1164
        %v1197 = vadd.f32 %v1051, %v1165
        %v1198 = vadd.f32 %v1052, %v1166
        %v1199 = vadd.f32 %v1053, %v1167
        %v1200 = vadd.f32 %v1054, %v1168
        %1201 = vset.pattern.permute.xlu0 2
        %1202 = vperm.xlu0 %1201, %v875
        %v1203 = vpop.permute.xlu0 %1202
        %1205 = vset.pattern.permute.xlu0 2
        %1206 = vperm.xlu0 %1205, %v876
        %v1207 = vpop.permute.xlu0 %1206
        %1209 = vset.pattern.permute.xlu0 2
        %1210 = vperm.xlu0 %1209, %v877
        %v1211 = vpop.permute.xlu0 %1210
        %1213 = vset.pattern.permute.xlu0 2
        %1214 = vperm.xlu0 %1213, %v878
        %v1215 = vpop.permute.xlu0 %1214
        %1217 = vset.pattern.permute.xlu0 2
        %1218 = vperm.xlu0 %1217, %v879
        %v1219 = vpop.permute.xlu0 %1218
        %1221 = vset.pattern.permute.xlu0 2
        %1222 = vperm.xlu0 %1221, %v880
        %v1223 = vpop.permute.xlu0 %1222
        %1225 = vset.pattern.permute.xlu0 2
        %1226 = vperm.xlu0 %1225, %v881
        %v1227 = vpop.permute.xlu0 %1226
        %1229 = vset.pattern.permute.xlu0 2
        %1230 = vperm.xlu0 %1229, %v882
        %v1231 = vpop.permute.xlu0 %1230
        %1233 = vset.pattern.permute.xlu0 2
        %1234 = vperm.xlu0 %1233, %v883
        %v1235 = vpop.permute.xlu0 %1234
        %1237 = vset.pattern.permute.xlu0 2
        %1238 = vperm.xlu0 %1237, %v884
        %v1239 = vpop.permute.xlu0 %1238
        %1241 = vset.pattern.permute.xlu0 2
        %1242 = vperm.xlu0 %1241, %v885
        %v1243 = vpop.permute.xlu0 %1242
        %1245 = vset.pattern.permute.xlu0 2
        %1246 = vperm.xlu0 %1245, %v886
        %v1247 = vpop.permute.xlu0 %1246
        %1249 = vset.pattern.permute.xlu0 2
        %1250 = vperm.xlu0 %1249, %v887
        %v1251 = vpop.permute.xlu0 %1250
        %1253 = vset.pattern.permute.xlu0 2
        %1254 = vperm.xlu0 %1253, %v888
        %v1255 = vpop.permute.xlu0 %1254
        %1257 = vset.pattern.permute.xlu0 2
        %1258 = vperm.xlu0 %1257, %v889
        %v1259 = vpop.permute.xlu0 %1258
        %1261 = vset.pattern.permute.xlu0 2
        %1262 = vperm.xlu0 %1261, %v890
        %v1263 = vpop.permute.xlu0 %1262
        %v1265 = vlaneseq
        %v1266 = vshrl.u32 %v1265, 7
        %v1267 = vsub.s32 2, %v1266
        %v1268 = vrot.slane %v891, %v1267
        %v1269 = vlaneseq
        %v1270 = vshrl.u32 %v1269, 7
        %v1271 = vsub.s32 6, %v1270
        %v1272 = vrot.slane %v891, %v1271
        %v1275 = vlaneseq
        %v1276 = vshrl.u32 %v1275, 7
        %v1277 = vsub.s32 2, %v1276
        %v1278 = vrot.slane %v1268, %v1277
        %v1279 = vlaneseq
        %v1280 = vshrl.u32 %v1279, 7
        %v1281 = vsub.s32 2, %v1280
        %v1282 = vrot.slane %v1272, %v1281
        %v1283 = vmul.f32 %v1203, %v1278
        %v1284 = vmul.f32 %v1203, %v1282
        %v1285 = vmul.f32 %v1207, %v1278
        %v1286 = vmul.f32 %v1207, %v1282
        %v1287 = vmul.f32 %v1211, %v1278
        %v1288 = vmul.f32 %v1211, %v1282
        %v1289 = vmul.f32 %v1215, %v1278
        %v1290 = vmul.f32 %v1215, %v1282
        %v1291 = vmul.f32 %v1219, %v1278
        %v1292 = vmul.f32 %v1219, %v1282
        %v1293 = vmul.f32 %v1223, %v1278
        %v1294 = vmul.f32 %v1223, %v1282
        %v1295 = vmul.f32 %v1227, %v1278
        %v1296 = vmul.f32 %v1227, %v1282
        %v1297 = vmul.f32 %v1231, %v1278
        %v1298 = vmul.f32 %v1231, %v1282
        %v1299 = vmul.f32 %v1235, %v1278
        %v1300 = vmul.f32 %v1235, %v1282
        %v1301 = vmul.f32 %v1239, %v1278
        %v1302 = vmul.f32 %v1239, %v1282
        %v1303 = vmul.f32 %v1243, %v1278
        %v1304 = vmul.f32 %v1243, %v1282
        %v1305 = vmul.f32 %v1247, %v1278
        %v1306 = vmul.f32 %v1247, %v1282
        %v1307 = vmul.f32 %v1251, %v1278
        %v1308 = vmul.f32 %v1251, %v1282
        %v1309 = vmul.f32 %v1255, %v1278
        %v1310 = vmul.f32 %v1255, %v1282
        %v1311 = vmul.f32 %v1259, %v1278
        %v1312 = vmul.f32 %v1259, %v1282
        %v1313 = vmul.f32 %v1263, %v1278
        %v1314 = vmul.f32 %v1263, %v1282
        %v1315 = vadd.f32 %v1169, %v1283
        %v1316 = vadd.f32 %v1170, %v1284
        %v1317 = vadd.f32 %v1171, %v1285
        %v1318 = vadd.f32 %v1172, %v1286
        %v1319 = vadd.f32 %v1173, %v1287
        %v1320 = vadd.f32 %v1174, %v1288
        %v1321 = vadd.f32 %v1175, %v1289
        %v1322 = vadd.f32 %v1176, %v1290
        %v1323 = vadd.f32 %v1177, %v1291
        %v1324 = vadd.f32 %v1178, %v1292
        %v1325 = vadd.f32 %v1179, %v1293
        %v1326 = vadd.f32 %v1180, %v1294
        %v1327 = vadd.f32 %v1181, %v1295
        %v1328 = vadd.f32 %v1182, %v1296
        %v1329 = vadd.f32 %v1183, %v1297
        %v1330 = vadd.f32 %v1184, %v1298
        %v1331 = vadd.f32 %v1185, %v1299
        %v1332 = vadd.f32 %v1186, %v1300
        %v1333 = vadd.f32 %v1187, %v1301
        %v1334 = vadd.f32 %v1188, %v1302
        %v1335 = vadd.f32 %v1189, %v1303
        %v1336 = vadd.f32 %v1190, %v1304
        %v1337 = vadd.f32 %v1191, %v1305
        %v1338 = vadd.f32 %v1192, %v1306
        %v1339 = vadd.f32 %v1193, %v1307
        %v1340 = vadd.f32 %v1194, %v1308
        %v1341 = vadd.f32 %v1195, %v1309
        %v1342 = vadd.f32 %v1196, %v1310
        %v1343 = vadd.f32 %v1197, %v1311
        %v1344 = vadd.f32 %v1198, %v1312
        %v1345 = vadd.f32 %v1199, %v1313
        %v1346 = vadd.f32 %v1200, %v1314
        %1347 = vset.pattern.permute.xlu0 3
        %1348 = vperm.xlu0 %1347, %v875
        %v1349 = vpop.permute.xlu0 %1348
        %1351 = vset.pattern.permute.xlu0 3
        %1352 = vperm.xlu0 %1351, %v876
        %v1353 = vpop.permute.xlu0 %1352
        %1355 = vset.pattern.permute.xlu0 3
        %1356 = vperm.xlu0 %1355, %v877
        %v1357 = vpop.permute.xlu0 %1356
        %1359 = vset.pattern.permute.xlu0 3
        %1360 = vperm.xlu0 %1359, %v878
        %v1361 = vpop.permute.xlu0 %1360
        %1363 = vset.pattern.permute.xlu0 3
        %1364 = vperm.xlu0 %1363, %v879
        %v1365 = vpop.permute.xlu0 %1364
        %1367 = vset.pattern.permute.xlu0 3
        %1368 = vperm.xlu0 %1367, %v880
        %v1369 = vpop.permute.xlu0 %1368
        %1371 = vset.pattern.permute.xlu0 3
        %1372 = vperm.xlu0 %1371, %v881
        %v1373 = vpop.permute.xlu0 %1372
        %1375 = vset.pattern.permute.xlu0 3
        %1376 = vperm.xlu0 %1375, %v882
        %v1377 = vpop.permute.xlu0 %1376
        %1379 = vset.pattern.permute.xlu0 3
        %1380 = vperm.xlu0 %1379, %v883
        %v1381 = vpop.permute.xlu0 %1380
        %1383 = vset.pattern.permute.xlu0 3
        %1384 = vperm.xlu0 %1383, %v884
        %v1385 = vpop.permute.xlu0 %1384
        %1387 = vset.pattern.permute.xlu0 3
        %1388 = vperm.xlu0 %1387, %v885
        %v1389 = vpop.permute.xlu0 %1388
        %1391 = vset.pattern.permute.xlu0 3
        %1392 = vperm.xlu0 %1391, %v886
        %v1393 = vpop.permute.xlu0 %1392
        %1395 = vset.pattern.permute.xlu0 3
        %1396 = vperm.xlu0 %1395, %v887
        %v1397 = vpop.permute.xlu0 %1396
        %1399 = vset.pattern.permute.xlu0 3
        %1400 = vperm.xlu0 %1399, %v888
        %v1401 = vpop.permute.xlu0 %1400
        %1403 = vset.pattern.permute.xlu0 3
        %1404 = vperm.xlu0 %1403, %v889
        %v1405 = vpop.permute.xlu0 %1404
        %1407 = vset.pattern.permute.xlu0 3
        %1408 = vperm.xlu0 %1407, %v890
        %v1409 = vpop.permute.xlu0 %1408
        %v1411 = vlaneseq
        %v1412 = vshrl.u32 %v1411, 7
        %v1413 = vsub.s32 3, %v1412
        %v1414 = vrot.slane %v891, %v1413
        %v1415 = vlaneseq
        %v1416 = vshrl.u32 %v1415, 7
        %v1417 = vsub.s32 7, %v1416
        %v1418 = vrot.slane %v891, %v1417
        %v1421 = vlaneseq
        %v1422 = vshrl.u32 %v1421, 7
        %v1423 = vsub.s32 3, %v1422
        %v1424 = vrot.slane %v1414, %v1423
        %v1425 = vlaneseq
        %v1426 = vshrl.u32 %v1425, 7
        %v1427 = vsub.s32 3, %v1426
        %v1428 = vrot.slane %v1418, %v1427
        %v1429 = vmul.f32 %v1349, %v1424
        %v1430 = vmul.f32 %v1349, %v1428
        %v1431 = vmul.f32 %v1353, %v1424
        %v1432 = vmul.f32 %v1353, %v1428
        %v1433 = vmul.f32 %v1357, %v1424
        %v1434 = vmul.f32 %v1357, %v1428
        %v1435 = vmul.f32 %v1361, %v1424
        %v1436 = vmul.f32 %v1361, %v1428
        %v1437 = vmul.f32 %v1365, %v1424
        %v1438 = vmul.f32 %v1365, %v1428
        %v1439 = vmul.f32 %v1369, %v1424
        %v1440 = vmul.f32 %v1369, %v1428
        %v1441 = vmul.f32 %v1373, %v1424
        %v1442 = vmul.f32 %v1373, %v1428
        %v1443 = vmul.f32 %v1377, %v1424
        %v1444 = vmul.f32 %v1377, %v1428
        %v1445 = vmul.f32 %v1381, %v1424
        %v1446 = vmul.f32 %v1381, %v1428
        %v1447 = vmul.f32 %v1385, %v1424
        %v1448 = vmul.f32 %v1385, %v1428
        %v1449 = vmul.f32 %v1389, %v1424
        %v1450 = vmul.f32 %v1389, %v1428
        %v1451 = vmul.f32 %v1393, %v1424
        %v1452 = vmul.f32 %v1393, %v1428
        %v1453 = vmul.f32 %v1397, %v1424
        %v1454 = vmul.f32 %v1397, %v1428
        %v1455 = vmul.f32 %v1401, %v1424
        %v1456 = vmul.f32 %v1401, %v1428
        %v1457 = vmul.f32 %v1405, %v1424
        %v1458 = vmul.f32 %v1405, %v1428
        %v1459 = vmul.f32 %v1409, %v1424
        %v1460 = vmul.f32 %v1409, %v1428
        %v1461 = vadd.f32 %v1315, %v1429
        %v1462 = vadd.f32 %v1316, %v1430
        %v1463 = vadd.f32 %v1317, %v1431
        %v1464 = vadd.f32 %v1318, %v1432
        %v1465 = vadd.f32 %v1319, %v1433
        %v1466 = vadd.f32 %v1320, %v1434
        %v1467 = vadd.f32 %v1321, %v1435
        %v1468 = vadd.f32 %v1322, %v1436
        %v1469 = vadd.f32 %v1323, %v1437
        %v1470 = vadd.f32 %v1324, %v1438
        %v1471 = vadd.f32 %v1325, %v1439
        %v1472 = vadd.f32 %v1326, %v1440
        %v1473 = vadd.f32 %v1327, %v1441
        %v1474 = vadd.f32 %v1328, %v1442
        %v1475 = vadd.f32 %v1329, %v1443
        %v1476 = vadd.f32 %v1330, %v1444
        %v1477 = vadd.f32 %v1331, %v1445
        %v1478 = vadd.f32 %v1332, %v1446
        %v1479 = vadd.f32 %v1333, %v1447
        %v1480 = vadd.f32 %v1334, %v1448
        %v1481 = vadd.f32 %v1335, %v1449
        %v1482 = vadd.f32 %v1336, %v1450
        %v1483 = vadd.f32 %v1337, %v1451
        %v1484 = vadd.f32 %v1338, %v1452
        %v1485 = vadd.f32 %v1339, %v1453
        %v1486 = vadd.f32 %v1340, %v1454
        %v1487 = vadd.f32 %v1341, %v1455
        %v1488 = vadd.f32 %v1342, %v1456
        %v1489 = vadd.f32 %v1343, %v1457
        %v1490 = vadd.f32 %v1344, %v1458
        %v1491 = vadd.f32 %v1345, %v1459
        %v1492 = vadd.f32 %v1346, %v1460
        %v1493 = vmax.f32 %v1461, 0.0
        %v1494 = vmax.f32 %v1462, 0.0
        %v1495 = vmax.f32 %v1463, 0.0
        %v1496 = vmax.f32 %v1464, 0.0
        %v1497 = vmax.f32 %v1465, 0.0
        %v1498 = vmax.f32 %v1466, 0.0
        %v1499 = vmax.f32 %v1467, 0.0
        %v1500 = vmax.f32 %v1468, 0.0
        %v1501 = vmax.f32 %v1469, 0.0
        %v1502 = vmax.f32 %v1470, 0.0
        %v1503 = vmax.f32 %v1471, 0.0
        %v1504 = vmax.f32 %v1472, 0.0
        %v1505 = vmax.f32 %v1473, 0.0
        %v1506 = vmax.f32 %v1474, 0.0
        %v1507 = vmax.f32 %v1475, 0.0
        %v1508 = vmax.f32 %v1476, 0.0
        %v1509 = vmax.f32 %v1477, 0.0
        %v1510 = vmax.f32 %v1478, 0.0
        %v1511 = vmax.f32 %v1479, 0.0
        %v1512 = vmax.f32 %v1480, 0.0
        %v1513 = vmax.f32 %v1481, 0.0
        %v1514 = vmax.f32 %v1482, 0.0
        %v1515 = vmax.f32 %v1483, 0.0
        %v1516 = vmax.f32 %v1484, 0.0
        %v1517 = vmax.f32 %v1485, 0.0
        %v1518 = vmax.f32 %v1486, 0.0
        %v1519 = vmax.f32 %v1487, 0.0
        %v1520 = vmax.f32 %v1488, 0.0
        %v1521 = vmax.f32 %v1489, 0.0
        %v1522 = vmax.f32 %v1490, 0.0
        %v1523 = vmax.f32 %v1491, 0.0
        %v1524 = vmax.f32 %v1492, 0.0
        %v1525 = vld [vmem:[%s7] sm:$0x3]
        %v1527 = vlaneseq
        %v1528 = vshrl.u32 %v1527, 7
        %v1529 = vsub.s32 0, %v1528
        %v1530 = vrot.slane %v1525, %v1529
        %v1531 = vlaneseq
        %v1532 = vshrl.u32 %v1531, 7
        %v1533 = vsub.s32 1, %v1532
        %v1534 = vrot.slane %v1525, %v1533
        %v1537 = vmul.f32 %v1493, %v1530
        %v1538 = vmul.f32 %v1494, %v1534
        %v1539 = vmul.f32 %v1495, %v1530
        %v1540 = vmul.f32 %v1496, %v1534
        %v1541 = vmul.f32 %v1497, %v1530
        %v1542 = vmul.f32 %v1498, %v1534
        %v1543 = vmul.f32 %v1499, %v1530
        %v1544 = vmul.f32 %v1500, %v1534
        %v1545 = vmul.f32 %v1501, %v1530
        %v1546 = vmul.f32 %v1502, %v1534
        %v1547 = vmul.f32 %v1503, %v1530
        %v1548 = vmul.f32 %v1504, %v1534
        %v1549 = vmul.f32 %v1505, %v1530
        %v1550 = vmul.f32 %v1506, %v1534
        %v1551 = vmul.f32 %v1507, %v1530
        %v1552 = vmul.f32 %v1508, %v1534
        %v1553 = vmul.f32 %v1509, %v1530
        %v1554 = vmul.f32 %v1510, %v1534
        %v1555 = vmul.f32 %v1511, %v1530
        %v1556 = vmul.f32 %v1512, %v1534
        %v1557 = vmul.f32 %v1513, %v1530
        %v1558 = vmul.f32 %v1514, %v1534
        %v1559 = vmul.f32 %v1515, %v1530
        %v1560 = vmul.f32 %v1516, %v1534
        %v1561 = vmul.f32 %v1517, %v1530
        %v1562 = vmul.f32 %v1518, %v1534
        %v1563 = vmul.f32 %v1519, %v1530
        %v1564 = vmul.f32 %v1520, %v1534
        %v1565 = vmul.f32 %v1521, %v1530
        %v1566 = vmul.f32 %v1522, %v1534
        %v1567 = vmul.f32 %v1523, %v1530
        %v1568 = vmul.f32 %v1524, %v1534
        %v1569 = vadd.f32 %v1537, %v1538
        %1570 = vadd.xlane.f32.xlu0 %v1569
        %v1571 = vpop.xlane.xlu0 %1570
        %v1572 = vadd.f32 %v1539, %v1540
        %1573 = vadd.xlane.f32.xlu0 %v1572
        %v1574 = vpop.xlane.xlu0 %1573
        %v1575 = vadd.f32 %v1541, %v1542
        %1576 = vadd.xlane.f32.xlu0 %v1575
        %v1577 = vpop.xlane.xlu0 %1576
        %v1578 = vadd.f32 %v1543, %v1544
        %1579 = vadd.xlane.f32.xlu0 %v1578
        %v1580 = vpop.xlane.xlu0 %1579
        %v1581 = vadd.f32 %v1545, %v1546
        %1582 = vadd.xlane.f32.xlu0 %v1581
        %v1583 = vpop.xlane.xlu0 %1582
        %v1584 = vadd.f32 %v1547, %v1548
        %1585 = vadd.xlane.f32.xlu0 %v1584
        %v1586 = vpop.xlane.xlu0 %1585
        %v1587 = vadd.f32 %v1549, %v1550
        %1588 = vadd.xlane.f32.xlu0 %v1587
        %v1589 = vpop.xlane.xlu0 %1588
        %v1590 = vadd.f32 %v1551, %v1552
        %1591 = vadd.xlane.f32.xlu0 %v1590
        %v1592 = vpop.xlane.xlu0 %1591
        %v1593 = vadd.f32 %v1553, %v1554
        %1594 = vadd.xlane.f32.xlu0 %v1593
        %v1595 = vpop.xlane.xlu0 %1594
        %v1596 = vadd.f32 %v1555, %v1556
        %1597 = vadd.xlane.f32.xlu0 %v1596
        %v1598 = vpop.xlane.xlu0 %1597
        %v1599 = vadd.f32 %v1557, %v1558
        %1600 = vadd.xlane.f32.xlu0 %v1599
        %v1601 = vpop.xlane.xlu0 %1600
        %v1602 = vadd.f32 %v1559, %v1560
        %1603 = vadd.xlane.f32.xlu0 %v1602
        %v1604 = vpop.xlane.xlu0 %1603
        %v1605 = vadd.f32 %v1561, %v1562
        %1606 = vadd.xlane.f32.xlu0 %v1605
        %v1607 = vpop.xlane.xlu0 %1606
        %v1608 = vadd.f32 %v1563, %v1564
        %1609 = vadd.xlane.f32.xlu0 %v1608
        %v1610 = vpop.xlane.xlu0 %1609
        %v1611 = vadd.f32 %v1565, %v1566
        %1612 = vadd.xlane.f32.xlu0 %v1611
        %v1613 = vpop.xlane.xlu0 %1612
        %v1614 = vadd.f32 %v1567, %v1568
        %1615 = vadd.xlane.f32.xlu0 %v1614
        %v1616 = vpop.xlane.xlu0 %1615
        %v1617 = vld [vmem:[#allocation2] sm:$0x1]
        %1619 = vset.pattern.permute.xlu0 0
        %1620 = vperm.xlu0 %1619, %v1617
        %v1621 = vpop.permute.xlu0 %1620
        %v1623 = vlaneseq
        %v1624 = vshrl.u32 %v1623, 7
        %v1625 = vsub.s32 0, %v1624
        %v1626 = vrot.slane %v1621, %v1625
        %v1627 = vadd.f32 %v1571, %v1626
        %v1628 = vadd.f32 %v1574, %v1626
        %v1629 = vadd.f32 %v1577, %v1626
        %v1630 = vadd.f32 %v1580, %v1626
        %v1631 = vadd.f32 %v1583, %v1626
        %v1632 = vadd.f32 %v1586, %v1626
        %v1633 = vadd.f32 %v1589, %v1626
        %v1634 = vadd.f32 %v1592, %v1626
        %v1635 = vadd.f32 %v1595, %v1626
        %v1636 = vadd.f32 %v1598, %v1626
        %v1637 = vadd.f32 %v1601, %v1626
        %v1638 = vadd.f32 %v1604, %v1626
        %v1639 = vadd.f32 %v1607, %v1626
        %v1640 = vadd.f32 %v1610, %v1626
        %v1641 = vadd.f32 %v1613, %v1626
        %v1642 = vadd.f32 %v1616, %v1626
        %v1659 = vlaneseq
        %v1660 = vand.u32 %v1659, 127
        %v1661 = vlaneseq
        %v1662 = vshrl.u32 %v1661, 7
        %v1663 = vsub.s32 %v1660, %v1662
        %v1664 = vrot.slane %v1627, %v1663
        %v1665 = vadd.s32 %v1660, 4294967288
        %v1666 = vlaneseq
        %v1667 = vshrl.u32 %v1666, 7
        %v1668 = vsub.s32 %v1665, %v1667
        %v1669 = vrot.slane %v1628, %v1668
        %vm1670 = vcmask 130112
        %v1671 = vsel %vm1670, %v1669, %v1664
        %v1672 = vadd.s32 %v1660, 4294967280
        %v1673 = vlaneseq
        %v1674 = vshrl.u32 %v1673, 7
        %v1675 = vsub.s32 %v1672, %v1674
        %v1676 = vrot.slane %v1629, %v1675
        %vm1677 = vcmask 195712
        %v1678 = vsel %vm1677, %v1676, %v1671
        %v1679 = vadd.s32 %v1660, 4294967272
        %v1680 = vlaneseq
        %v1681 = vshrl.u32 %v1680, 7
        %v1682 = vsub.s32 %v1679, %v1681
        %v1683 = vrot.slane %v1630, %v1682
        %vm1684 = vcmask 261312
        %v1685 = vsel %vm1684, %v1683, %v1678
        %v1686 = vadd.s32 %v1660, 4294967264
        %v1687 = vlaneseq
        %v1688 = vshrl.u32 %v1687, 7
        %v1689 = vsub.s32 %v1686, %v1688
        %v1690 = vrot.slane %v1631, %v1689
        %vm1691 = vcmask 326912
        %v1692 = vsel %vm1691, %v1690, %v1685
        %v1693 = vadd.s32 %v1660, 4294967256
        %v1694 = vlaneseq
        %v1695 = vshrl.u32 %v1694, 7
        %v1696 = vsub.s32 %v1693, %v1695
        %v1697 = vrot.slane %v1632, %v1696
        %vm1698 = vcmask 392512
        %v1699 = vsel %vm1698, %v1697, %v1692
        %v1700 = vadd.s32 %v1660, 4294967248
        %v1701 = vlaneseq
        %v1702 = vshrl.u32 %v1701, 7
        %v1703 = vsub.s32 %v1700, %v1702
        %v1704 = vrot.slane %v1633, %v1703
        %vm1705 = vcmask 458112
        %v1706 = vsel %vm1705, %v1704, %v1699
        %v1707 = vadd.s32 %v1660, 4294967240
        %v1708 = vlaneseq
        %v1709 = vshrl.u32 %v1708, 7
        %v1710 = vsub.s32 %v1707, %v1709
        %v1711 = vrot.slane %v1634, %v1710
        %vm1712 = vcmask 523712
        %v1713 = vsel %vm1712, %v1711, %v1706
        %v1714 = vadd.s32 %v1660, 4294967232
        %v1715 = vlaneseq
        %v1716 = vshrl.u32 %v1715, 7
        %v1717 = vsub.s32 %v1714, %v1716
        %v1718 = vrot.slane %v1635, %v1717
        %vm1719 = vcmask 589312
        %v1720 = vsel %vm1719, %v1718, %v1713
        %v1721 = vadd.s32 %v1660, 4294967224
        %v1722 = vlaneseq
        %v1723 = vshrl.u32 %v1722, 7
        %v1724 = vsub.s32 %v1721, %v1723
        %v1725 = vrot.slane %v1636, %v1724
        %vm1726 = vcmask 654912
        %v1727 = vsel %vm1726, %v1725, %v1720
        %v1728 = vadd.s32 %v1660, 4294967216
        %v1729 = vlaneseq
        %v1730 = vshrl.u32 %v1729, 7
        %v1731 = vsub.s32 %v1728, %v1730
        %v1732 = vrot.slane %v1637, %v1731
        %vm1733 = vcmask 720512
        %v1734 = vsel %vm1733, %v1732, %v1727
        %v1735 = vadd.s32 %v1660, 4294967208
        %v1736 = vlaneseq
        %v1737 = vshrl.u32 %v1736, 7
        %v1738 = vsub.s32 %v1735, %v1737
        %v1739 = vrot.slane %v1638, %v1738
        %vm1740 = vcmask 786112
        %v1741 = vsel %vm1740, %v1739, %v1734
        %v1742 = vadd.s32 %v1660, 4294967200
        %v1743 = vlaneseq
        %v1744 = vshrl.u32 %v1743, 7
        %v1745 = vsub.s32 %v1742, %v1744
        %v1746 = vrot.slane %v1639, %v1745
        %vm1747 = vcmask 851712
        %v1748 = vsel %vm1747, %v1746, %v1741
        %v1749 = vadd.s32 %v1660, 4294967192
        %v1750 = vlaneseq
        %v1751 = vshrl.u32 %v1750, 7
        %v1752 = vsub.s32 %v1749, %v1751
        %v1753 = vrot.slane %v1640, %v1752
        %vm1754 = vcmask 917312
        %v1755 = vsel %vm1754, %v1753, %v1748
        %v1756 = vadd.s32 %v1660, 4294967184
        %v1757 = vlaneseq
        %v1758 = vshrl.u32 %v1757, 7
        %v1759 = vsub.s32 %v1756, %v1758
        %v1760 = vrot.slane %v1641, %v1759
        %vm1761 = vcmask 982912
        %v1762 = vsel %vm1761, %v1760, %v1755
        %v1763 = vadd.s32 %v1660, 4294967176
        %v1764 = vlaneseq
        %v1765 = vshrl.u32 %v1764, 7
        %v1766 = vsub.s32 %v1763, %v1765
        %v1767 = vrot.slane %v1642, %v1766
        %vm1768 = vcmask 1048512
        %v1769 = vsel %vm1768, %v1767, %v1762
        %1771 = vst [vmem:[%s343] sm:$0x1] %v1769
        %s1772 = sand.u32 %s232, 1
        %s1773 = scalar_lea.sflag [#allocation4], %s1772
        %s1774 = sand.u32 %s232, 1
        %s1775 = scalar_lea.vmem [#allocation3], %s1774
        // Predicated region
        $region57: #{critic_forward.1} parent=55 // pred_check
          %p1776 = pneg %p242
        $region58: #{critic_forward.1} parent=55 // pred_check_branch
          %1778 = sbr.rel (%p1776) target = $region60
        $region59: #{critic_forward.1} parent=55 // pred_region
          %s1780 = ssub.s32 16, 16
          %1781 = vsyncadd %s1773, %s1780
          %s1782 = smul.addr %s25, 16
          %s1783 = scalar_lea.hbm %s9, %s1782
          %s1785 = sshll.u32 %s1775, 4
          %s1786 = int_to_ptr.vmem [resolvable:$true] %s1785
          %1788 = dma.vmem_to_hbm [thread:$0]  %s1786, 16, %s1783, %s1773
        $region60: #{critic_forward.1} parent=55 // pred_fallthru
          _
      $region56: #{critic_forward.1} parent=5 // pred_fallthru
        _
      %p1789 = scmp.le.s32.totalorder 2, %s20
      // Predicated region
      $region61: #{critic_forward.1} parent=5 // pred_check
        %p1790 = pneg %p1789
      $region62: #{critic_forward.1} parent=5 // pred_check_branch
        %1792 = sbr.rel (%p1790) target = $region64
      $region63: #{critic_forward.1} parent=5 // pred_region
        %s1793 = ssub.s32 %s20, 2
        // Predicated region
        $region65: #{critic_forward.1} parent=63 // pred_check
          %p1794 = pneg %p248
        $region66: #{critic_forward.1} parent=63 // pred_check_branch
          %1796 = sbr.rel (%p1794) target = $region68
        $region67: #{critic_forward.1} parent=63 // pred_region
          %s1797 = sand.u32 %s233, 1
          %s1798 = scalar_lea.sflag [#allocation4], %s1797
          %s1799 = sand.u32 %s233, 1
          %s1800 = scalar_lea.vmem [#allocation3], %s1799
          %1801 = dma.done %s1798, 16
        $region68: #{critic_forward.1} parent=63 // pred_fallthru
          _
      $region64: #{critic_forward.1} parent=5 // pred_fallthru
        _
    $region6: #{critic_forward.1} parent=1 // loop_footer
      %s24 = sadd.s32 1, %s20
    $region7: #{critic_forward.1} parent=1 // loop_footer_branch
      %19 = sbr.rel target = $region3
    $region8: #{critic_forward.1} parent=1 // loop_exit
      _
    %1802 = vsyncpa [#allocation4], 1
    %s1803 = scalar_lea.sflag [#allocation4], 1
    %1804 = vsyncpa %s1803, 1

</llo_original>
